<compile_context>
chip_gen: v7x
topology: tpu7x:2x2x1
jax: 0.10.0
libtpu: 0.0.40
codegen_flags: <defaults>
</compile_context>

<pallas_src>
import functools

import jax
import jax.numpy as jnp
from jax.experimental import pallas as pl
from jax.experimental.pallas import tpu as pltpu


def _round_up(x, m):
    return ((x + m - 1) // m) * m


def _cross_attn_kernel(q_ref, kv_ref,
                       wq_ref, bq_ref,
                       wk_ref, bk_ref,
                       wv_ref, bv_ref,
                       w1_ref, b1_ref,
                       w2_ref, b2_ref,
                       o_ref, *, skv_valid):
    # q_ref: (Bblk, Sq_p, Dp) bf16, kv_ref: (Bblk, Skv_p, Dp) bf16
    # w*_ref: (Dp, Dp) bf16 already transposed to (in, out); b*_ref: (1, Dp) f32
    Bblk, Sq, Dp = q_ref.shape
    _, Skv_p, _ = kv_ref.shape

    # Residual path in f32.
    q_f32 = q_ref[...].astype(jnp.float32)                          # (Bblk,Sq,Dp)

    # Fuse (batch, seq) rows so the projection/FFN matmuls see M = Bblk*Sq.
    q_rows = q_ref[...].reshape(Bblk * Sq, Dp)                      # bf16
    kv_rows = kv_ref[...].reshape(Bblk * Skv_p, Dp)                 # bf16, no f32 trip

    bq = bq_ref[...]
    bk = bk_ref[...]
    bv = bv_ref[...]
    b1 = b1_ref[...]
    b2 = b2_ref[...]

    # Projections: bf16 operands, f32 MXU accumulation. 1/sqrt(D) is folded
    # into wq/bq, so Q already carries the attention scale.
    Q = jnp.dot(q_rows, wq_ref[...], preferred_element_type=jnp.float32) + bq
    K = jnp.dot(kv_rows, wk_ref[...], preferred_element_type=jnp.float32) + bk
    V = jnp.dot(kv_rows, wv_ref[...], preferred_element_type=jnp.float32) + bv

    Qb = Q.reshape(Bblk, Sq, Dp).astype(jnp.bfloat16)
    Kb = K.reshape(Bblk, Skv_p, Dp).astype(jnp.bfloat16)
    Vb = V.reshape(Bblk, Skv_p, Dp).astype(jnp.bfloat16)

    # Scores: contract the last dims directly (no K transpose materialized).
    scores = jnp.einsum("bqd,bkd->bqk", Qb, Kb,
                        preferred_element_type=jnp.float32)         # (Bblk,Sq,Skv_p)

    # Mask padded key positions (Skv was padded to a lane-dense multiple of 128).
    if skv_valid < Skv_p:
        kidx = jax.lax.broadcasted_iota(jnp.int32, (1, 1, Skv_p), 2)
        scores = jnp.where(kidx < skv_valid, scores, -1e30)

    # Numerically stable softmax in f32; reciprocal on the EUP.
    m = jnp.max(scores, axis=-1, keepdims=True)
    e = jnp.exp(scores - m)
    denom = jnp.sum(e, axis=-1, keepdims=True)
    attn = e * pl.reciprocal(denom, approx=True)

    ctx = jnp.einsum("bqk,bkd->bqd", attn.astype(jnp.bfloat16), Vb,
                     preferred_element_type=jnp.float32)            # (Bblk,Sq,Dp)

    # Residual + FFN (Linear -> ReLU -> Linear), rows fused again.
    h = (ctx + q_f32).reshape(Bblk * Sq, Dp).astype(jnp.bfloat16)
    h1 = jnp.dot(h, w1_ref[...], preferred_element_type=jnp.float32) + b1
    h1 = jnp.maximum(h1, 0.0).astype(jnp.bfloat16)
    out = jnp.dot(h1, w2_ref[...], preferred_element_type=jnp.float32) + b2

    o_ref[...] = out.reshape(Bblk, Sq, Dp).astype(o_ref.dtype)


def _pick_block_b(B, sq_pad, target_rows=512):
    """Batch elements per grid step.

    Targets ~512 fused rows per step (amortizes per-step overhead, keeps the
    MXU row dim full on all generations) but caps bblk at ceil(B/2) so the
    parallel batch axis always has >= 2 steps for v7x's two TensorCores.
    Non-divisor B is handled by padding B up to a multiple of bblk in the
    wrapper, so we never fall back to bblk=1 for awkward B.
    """
    cap_rows = max(1, -(-target_rows // max(sq_pad, 1)))
    bblk = min(B, cap_rows)
    if B >= 2:
        bblk = min(bblk, -(-B // 2))
    return max(1, bblk)


def _vmem_limit_bytes():
    """~85% of physical VMEM, capped at 112 MiB (v7x ~54 MiB, v5e/v6e ~108 MiB)."""
    default = 64 * 1024 * 1024
    try:
        info = pltpu.get_tpu_info()
        cap = int(getattr(info, "vmem_capacity_bytes", default))
    except Exception:
        cap = default
    return min(int(cap * 0.85), 112 * 1024 * 1024)


def cross_attention_fusion(q, kv, params):
    """q: (B, Sq, D), kv: (B, Skv, D). params: PyTorch-layout (out, in) weights."""
    B, Sq, D = q.shape
    _, Skv, _ = kv.shape
    out_dtype = q.dtype

    # Lane-dense padded shapes.
    Dp = _round_up(D, 128)
    Sq_p = _round_up(Sq, 8)
    Skv_p = _round_up(Skv, 128)

    scale = 1.0 / (float(D) ** 0.5)

    # nn.Linear stores W as (out, in). Pre-transpose to (in, out), fold the
    # attention scale into the query projection, zero-pad to (Dp, Dp), bf16.
    def prep_w(w, s=1.0):
        wt = (w.T.astype(jnp.float32) * s)
        wt = jnp.pad(wt, ((0, Dp - D), (0, Dp - D)))
        return wt.astype(jnp.bfloat16)

    def prep_b(b, s=1.0):
        bb = b.reshape(1, -1).astype(jnp.float32) * s
        return jnp.pad(bb, ((0, 0), (0, Dp - D)))

    wq = prep_w(params["wq"], scale); bq = prep_b(params["bq"], scale)
    wk = prep_w(params["wk"]);        bk = prep_b(params["bk"])
    wv = prep_w(params["wv"]);        bv = prep_b(params["bv"])
    w1 = prep_w(params["w1"]);        b1 = prep_b(params["b1"])
    w2 = prep_w(params["w2"]);        b2 = prep_b(params["b2"])

    bblk = _pick_block_b(B, Sq_p)
    B_pad = _round_up(B, bblk)
    grid = (B_pad // bblk,)

    # bf16 activation transport (halves q/kv HBM bytes); zero-pad to lane-dense
    # shapes. Padded keys are masked inside the kernel; padded batch/query rows
    # are computed (cheap, finite) and sliced away below.
    qp = jnp.pad(q.astype(jnp.bfloat16),
                 ((0, B_pad - B), (0, Sq_p - Sq), (0, Dp - D)))
    kvp = jnp.pad(kv.astype(jnp.bfloat16),
                  ((0, B_pad - B), (0, Skv_p - Skv), (0, Dp - D)))

    # Grid-invariant weights/biases: whole-array VMEM residents.
    resident = pl.BlockSpec(memory_space=pltpu.MemorySpace.VMEM)

    in_specs = [
        pl.BlockSpec((bblk, Sq_p, Dp), lambda b: (b, 0, 0)),    # q
        pl.BlockSpec((bblk, Skv_p, Dp), lambda b: (b, 0, 0)),   # kv
        resident, resident,                                     # wq, bq
        resident, resident,                                     # wk, bk
        resident, resident,                                     # wv, bv
        resident, resident,                                     # w1, b1
        resident, resident,                                     # w2, b2
    ]
    out_spec = pl.BlockSpec((bblk, Sq_p, Dp), lambda b: (b, 0, 0))

    kernel = functools.partial(_cross_attn_kernel, skv_valid=Skv)

    fn = pl.pallas_call(
        kernel,
        out_shape=jax.ShapeDtypeStruct((B_pad, Sq_p, Dp), out_dtype),
        grid_spec=pltpu.PrefetchScalarGridSpec(
            num_scalar_prefetch=0,
            grid=grid,
            in_specs=in_specs,
            out_specs=out_spec,
        ),
        compiler_params=pltpu.CompilerParams(
            dimension_semantics=("parallel",),
            vmem_limit_bytes=_vmem_limit_bytes(),
        ),
    )
    out_padded = fn(qp, kvp, wq, bq, wk, bk, wv, bv, w1, b1, w2, b2)
    return out_padded[:B, :Sq, :D]


def init_params(key, D, dtype=jnp.float32):
    """Deterministic synthetic init matching nn.Linear shapes (out, in)."""
    ks = jax.random.split(key, 10)
    scale = 1.0 / jnp.sqrt(jnp.float32(D))

    def lin(kw, kb):
        w = jax.random.uniform(kw, (D, D), dtype, -scale, scale)
        b = jax.random.uniform(kb, (D,), dtype, -scale, scale)
        return w, b

    wq, bq = lin(ks[0], ks[1])
    wk, bk = lin(ks[2], ks[3])
    wv, bv = lin(ks[4], ks[5])
    w1, b1 = lin(ks[6], ks[7])
    w2, b2 = lin(ks[8], ks[9])
    return dict(wq=wq, bq=bq, wk=wk, bk=bk, wv=wv, bv=bv,
                w1=w1, b1=b1, w2=w2, b2=b2)


def reference(q, kv, p):
    """Pure-JAX f32 reference of the PyTorch forward, for verification."""
    def linear(x, w, b):
        return x @ w.T + b
    Q = linear(q, p["wq"], p["bq"])
    K = linear(kv, p["wk"], p["bk"])
    V = linear(kv, p["wv"], p["bv"])
    scores = jnp.einsum("bqd,bkd->bqk", Q, K) / jnp.sqrt(jnp.float32(Q.shape[-1]))
    attn = jax.nn.softmax(scores, axis=-1)
    ctx = jnp.einsum("bqk,bkd->bqd", attn, V)
    h = ctx + q
    h1 = jnp.maximum(linear(h, p["w1"], p["b1"]), 0.0)
    return linear(h1, p["w2"], p["b2"])


if __name__ == "__main__":
    B, Sq, Skv, D = 2, 8, 8, 32
    key = jax.random.PRNGKey(0)
    kq, kkv, kp = jax.random.split(key, 3)
    q = jax.random.normal(kq, (B, Sq, D), jnp.float32)
    kv = jax.random.normal(kkv, (B, Skv, D), jnp.float32)
    params = init_params(kp, D)

    out = cross_attention_fusion(q, kv, params)
    out = jax.block_until_ready(out)

    ref = reference(q, kv, params)
    assert out.shape == (B, Sq, D)
    # bf16 activations/weights + approx softmax reciprocal -> loosened tolerance.
    max_err = jnp.max(jnp.abs(out - ref))
    assert jnp.allclose(out, ref, atol=5e-2, rtol=5e-2), \
        f"max abs err {max_err}"
    print("KERNEL_OK")
</pallas_src>

<mosaic_0001>
module attributes {stable_mosaic.version = 11 : i64} {
  func.func @_cross_attn_kernel(%arg0: i32, %arg1: memref<1x8x128xbf16, #tpu.memory_space<vmem>>, %arg2: memref<1x128x128xbf16, #tpu.memory_space<vmem>>, %arg3: memref<128x128xbf16, #tpu.memory_space<vmem>>, %arg4: memref<1x128xf32, #tpu.memory_space<vmem>>, %arg5: memref<128x128xbf16, #tpu.memory_space<vmem>>, %arg6: memref<1x128xf32, #tpu.memory_space<vmem>>, %arg7: memref<128x128xbf16, #tpu.memory_space<vmem>>, %arg8: memref<1x128xf32, #tpu.memory_space<vmem>>, %arg9: memref<128x128xbf16, #tpu.memory_space<vmem>>, %arg10: memref<1x128xf32, #tpu.memory_space<vmem>>, %arg11: memref<128x128xbf16, #tpu.memory_space<vmem>>, %arg12: memref<1x128xf32, #tpu.memory_space<vmem>>, %arg13: memref<1x8x128xf32, #tpu.memory_space<vmem>>) attributes {dimension_semantics = [#tpu.dimension_semantics<parallel>], iteration_bounds = array<i64: 2>, scalar_prefetch = 0 : i64, scratch_operands = 0 : i64, tpu.core_type = #tpu.core_type<tc>, window_params = [{transform_indices = @transform_0, window_bounds = array<i64: 1, 8, 128>}, {transform_indices = @transform_1, window_bounds = array<i64: 1, 128, 128>}, {pipeline_mode = #tpu.pipeline_mode<synchronous>, transform_indices = @transform_2, window_bounds = array<i64: 128, 128>}, {pipeline_mode = #tpu.pipeline_mode<synchronous>, transform_indices = @transform_3, window_bounds = array<i64: 1, 128>}, {pipeline_mode = #tpu.pipeline_mode<synchronous>, transform_indices = @transform_4, window_bounds = array<i64: 128, 128>}, {pipeline_mode = #tpu.pipeline_mode<synchronous>, transform_indices = @transform_5, window_bounds = array<i64: 1, 128>}, {pipeline_mode = #tpu.pipeline_mode<synchronous>, transform_indices = @transform_6, window_bounds = array<i64: 128, 128>}, {pipeline_mode = #tpu.pipeline_mode<synchronous>, transform_indices = @transform_7, window_bounds = array<i64: 1, 128>}, {pipeline_mode = #tpu.pipeline_mode<synchronous>, transform_indices = @transform_8, window_bounds = array<i64: 128, 128>}, {pipeline_mode = #tpu.pipeline_mode<synchronous>, transform_indices = @transform_9, window_bounds = array<i64: 1, 128>}, {pipeline_mode = #tpu.pipeline_mode<synchronous>, transform_indices = @transform_10, window_bounds = array<i64: 128, 128>}, {pipeline_mode = #tpu.pipeline_mode<synchronous>, transform_indices = @transform_11, window_bounds = array<i64: 1, 128>}, {transform_indices = @transform_12, window_bounds = array<i64: 1, 8, 128>}]} {
    %c0 = arith.constant 0 : index
    %c0_0 = arith.constant 0 : index
    %c0_1 = arith.constant 0 : index
    %0 = vector.load %arg1[%c0, %c0_0, %c0_1] : memref<1x8x128xbf16, #tpu.memory_space<vmem>>, vector<1x8x128xbf16>
    %1 = arith.extf %0 : vector<1x8x128xbf16> to vector<1x8x128xf32>
    %c0_2 = arith.constant 0 : index
    %c0_3 = arith.constant 0 : index
    %c0_4 = arith.constant 0 : index
    %2 = vector.load %arg1[%c0_2, %c0_3, %c0_4] : memref<1x8x128xbf16, #tpu.memory_space<vmem>>, vector<1x8x128xbf16>
    %3 = vector.shape_cast %2 : vector<1x8x128xbf16> to vector<8x128xbf16>
    %c0_5 = arith.constant 0 : index
    %c0_6 = arith.constant 0 : index
    %c0_7 = arith.constant 0 : index
    %4 = vector.load %arg2[%c0_5, %c0_6, %c0_7] : memref<1x128x128xbf16, #tpu.memory_space<vmem>>, vector<1x128x128xbf16>
    %5 = vector.shape_cast %4 : vector<1x128x128xbf16> to vector<128x128xbf16>
    %c0_8 = arith.constant 0 : index
    %c0_9 = arith.constant 0 : index
    %6 = vector.load %arg4[%c0_8, %c0_9] : memref<1x128xf32, #tpu.memory_space<vmem>>, vector<1x128xf32>
    %c0_10 = arith.constant 0 : index
    %c0_11 = arith.constant 0 : index
    %7 = vector.load %arg6[%c0_10, %c0_11] : memref<1x128xf32, #tpu.memory_space<vmem>>, vector<1x128xf32>
    %c0_12 = arith.constant 0 : index
    %c0_13 = arith.constant 0 : index
    %8 = vector.load %arg8[%c0_12, %c0_13] : memref<1x128xf32, #tpu.memory_space<vmem>>, vector<1x128xf32>
    %c0_14 = arith.constant 0 : index
    %c0_15 = arith.constant 0 : index
    %9 = vector.load %arg10[%c0_14, %c0_15] : memref<1x128xf32, #tpu.memory_space<vmem>>, vector<1x128xf32>
    %c0_16 = arith.constant 0 : index
    %c0_17 = arith.constant 0 : index
    %10 = vector.load %arg12[%c0_16, %c0_17] : memref<1x128xf32, #tpu.memory_space<vmem>>, vector<1x128xf32>
    %c0_18 = arith.constant 0 : index
    %c0_19 = arith.constant 0 : index
    %11 = vector.load %arg3[%c0_18, %c0_19] : memref<128x128xbf16, #tpu.memory_space<vmem>>, vector<128x128xbf16>
    %cst = arith.constant dense<0.000000e+00> : vector<8x128xf32>
    %12 = tpu.matmul %3, %11, %cst {dimension_numbers = #tpu.dot_dimension_numbers<[1], [0], [0], [1], [0, 0, 1, 1], [], []>} : vector<8x128xbf16>, vector<128x128xbf16>, vector<8x128xf32> -> vector<8x128xf32>
    %13 = vector.broadcast %6 : vector<1x128xf32> to vector<8x128xf32>
    %14 = arith.addf %12, %13 : vector<8x128xf32>
    %c0_20 = arith.constant 0 : index
    %c0_21 = arith.constant 0 : index
    %15 = vector.load %arg5[%c0_20, %c0_21] : memref<128x128xbf16, #tpu.memory_space<vmem>>, vector<128x128xbf16>
    %cst_22 = arith.constant dense<0.000000e+00> : vector<128x128xf32>
    %16 = tpu.matmul %5, %15, %cst_22 {dimension_numbers = #tpu.dot_dimension_numbers<[1], [0], [0], [1], [0, 0, 1, 1], [], []>} : vector<128x128xbf16>, vector<128x128xbf16>, vector<128x128xf32> -> vector<128x128xf32>
    %17 = vector.broadcast %7 : vector<1x128xf32> to vector<128x128xf32>
    %18 = arith.addf %16, %17 : vector<128x128xf32>
    %c0_23 = arith.constant 0 : index
    %c0_24 = arith.constant 0 : index
    %19 = vector.load %arg7[%c0_23, %c0_24] : memref<128x128xbf16, #tpu.memory_space<vmem>>, vector<128x128xbf16>
    %cst_25 = arith.constant dense<0.000000e+00> : vector<128x128xf32>
    %20 = tpu.matmul %5, %19, %cst_25 {dimension_numbers = #tpu.dot_dimension_numbers<[1], [0], [0], [1], [0, 0, 1, 1], [], []>} : vector<128x128xbf16>, vector<128x128xbf16>, vector<128x128xf32> -> vector<128x128xf32>
    %21 = vector.broadcast %8 : vector<1x128xf32> to vector<128x128xf32>
    %22 = arith.addf %20, %21 : vector<128x128xf32>
    %23 = vector.shape_cast %14 : vector<8x128xf32> to vector<1x8x128xf32>
    %24 = arith.truncf %23 : vector<1x8x128xf32> to vector<1x8x128xbf16>
    %25 = vector.shape_cast %18 : vector<128x128xf32> to vector<1x128x128xf32>
    %26 = arith.truncf %25 : vector<1x128x128xf32> to vector<1x128x128xbf16>
    %27 = vector.shape_cast %22 : vector<128x128xf32> to vector<1x128x128xf32>
    %28 = arith.truncf %27 : vector<1x128x128xf32> to vector<1x128x128xbf16>
    "tpu.trace_start"() <{level = 10 : i32, message = "bqd,bkd->bqk"}> : () -> ()
    %cst_26 = arith.constant dense<0.000000e+00> : vector<1x8x128xf32>
    %29 = tpu.matmul %24, %26, %cst_26 {dimension_numbers = #tpu.dot_dimension_numbers<[2], [2], [1], [1], [0, 0, 0, 1, 1, 1], [0], [0]>} : vector<1x8x128xbf16>, vector<1x128x128xbf16>, vector<1x8x128xf32> -> vector<1x8x128xf32>
    "tpu.trace_stop"() : () -> ()
    %30 = tpu.iota {dimensions = array<i32: 2>} : vector<1x1x128xi32>
    %c8_i32 = arith.constant 8 : i32
    %31 = vector.broadcast %c8_i32 : i32 to vector<1x1x128xi32>
    %32 = arith.cmpi slt, %30, %31 : vector<1x1x128xi32>
    %cst_27 = arith.constant -1.000000e+30 : f32
    %33 = vector.shape_cast %32 : vector<1x1x128xi1> to vector<1x1x128xi1>
    %34 = vector.broadcast %33 : vector<1x1x128xi1> to vector<1x8x128xi1>
    %35 = vector.broadcast %cst_27 : f32 to vector<1x8x128xf32>
    %36 = arith.select %34, %29, %35 : vector<1x8x128xi1>, vector<1x8x128xf32>
    %cst_28 = arith.constant dense<0xFF800000> : vector<1x8xf32>
    %37 = vector.multi_reduction <maximumf>, %36, %cst_28 [2] : vector<1x8x128xf32> to vector<1x8xf32>
    %38 = vector.shape_cast %37 : vector<1x8xf32> to vector<1x8x1xf32>
    %39 = vector.broadcast %38 : vector<1x8x1xf32> to vector<1x8x128xf32>
    %40 = arith.subf %36, %39 : vector<1x8x128xf32>
    %41 = math.exp %40 : vector<1x8x128xf32>
    %cst_29 = arith.constant dense<0.000000e+00> : vector<1x8xf32>
    %42 = vector.multi_reduction <add>, %41, %cst_29 [2] : vector<1x8x128xf32> to vector<1x8xf32>
    %43 = vector.shape_cast %42 : vector<1x8xf32> to vector<1x8x1xf32>
    %44 = tpu.reciprocal %43 {approx = true} : vector<1x8x1xf32> -> vector<1x8x1xf32>
    %45 = vector.broadcast %44 : vector<1x8x1xf32> to vector<1x8x128xf32>
    %46 = arith.mulf %41, %45 : vector<1x8x128xf32>
    %47 = arith.truncf %46 : vector<1x8x128xf32> to vector<1x8x128xbf16>
    "tpu.trace_start"() <{level = 10 : i32, message = "bqk,bkd->bqd"}> : () -> ()
    %cst_30 = arith.constant dense<0.000000e+00> : vector<1x8x128xf32>
    %48 = tpu.matmul %47, %28, %cst_30 {dimension_numbers = #tpu.dot_dimension_numbers<[2], [1], [1], [2], [0, 0, 0, 1, 1, 2], [0], [0]>} : vector<1x8x128xbf16>, vector<1x128x128xbf16>, vector<1x8x128xf32> -> vector<1x8x128xf32>
    "tpu.trace_stop"() : () -> ()
    %49 = arith.addf %48, %1 : vector<1x8x128xf32>
    %50 = vector.shape_cast %49 : vector<1x8x128xf32> to vector<8x128xf32>
    %51 = arith.truncf %50 : vector<8x128xf32> to vector<8x128xbf16>
    %c0_31 = arith.constant 0 : index
    %c0_32 = arith.constant 0 : index
    %52 = vector.load %arg9[%c0_31, %c0_32] : memref<128x128xbf16, #tpu.memory_space<vmem>>, vector<128x128xbf16>
    %cst_33 = arith.constant dense<0.000000e+00> : vector<8x128xf32>
    %53 = tpu.matmul %51, %52, %cst_33 {dimension_numbers = #tpu.dot_dimension_numbers<[1], [0], [0], [1], [0, 0, 1, 1], [], []>} : vector<8x128xbf16>, vector<128x128xbf16>, vector<8x128xf32> -> vector<8x128xf32>
    %54 = vector.broadcast %9 : vector<1x128xf32> to vector<8x128xf32>
    %55 = arith.addf %53, %54 : vector<8x128xf32>
    %cst_34 = arith.constant 0.000000e+00 : f32
    %56 = vector.broadcast %cst_34 : f32 to vector<8x128xf32>
    %57 = arith.maximumf %55, %56 : vector<8x128xf32>
    %58 = arith.truncf %57 : vector<8x128xf32> to vector<8x128xbf16>
    %c0_35 = arith.constant 0 : index
    %c0_36 = arith.constant 0 : index
    %59 = vector.load %arg11[%c0_35, %c0_36] : memref<128x128xbf16, #tpu.memory_space<vmem>>, vector<128x128xbf16>
    %cst_37 = arith.constant dense<0.000000e+00> : vector<8x128xf32>
    %60 = tpu.matmul %58, %59, %cst_37 {dimension_numbers = #tpu.dot_dimension_numbers<[1], [0], [0], [1], [0, 0, 1, 1], [], []>} : vector<8x128xbf16>, vector<128x128xbf16>, vector<8x128xf32> -> vector<8x128xf32>
    %61 = vector.broadcast %10 : vector<1x128xf32> to vector<8x128xf32>
    %62 = arith.addf %60, %61 : vector<8x128xf32>
    %63 = vector.shape_cast %62 : vector<8x128xf32> to vector<1x8x128xf32>
    %c0_38 = arith.constant 0 : index
    %c0_39 = arith.constant 0 : index
    %c0_40 = arith.constant 0 : index
    %64 = vector.load %arg13[%c0_38, %c0_39, %c0_40] : memref<1x8x128xf32, #tpu.memory_space<vmem>>, vector<1x8x128xf32>
    tpu.vector_store %arg13[%c0_38, %c0_39, %c0_40], %63 {strides = array<i32>} : memref<1x8x128xf32, #tpu.memory_space<vmem>>, vector<1x8x128xf32>,
    return
  }
  func.func @transform_0(%arg0: i32) -> (i32, i32, i32) {
    %c0_i32 = arith.constant 0 : i32
    %c0_i32_0 = arith.constant 0 : i32
    %c0_i32_1 = arith.constant 0 : i32
    return %arg0, %c0_i32, %c0_i32_0 : i32, i32, i32
  }
  func.func @transform_1(%arg0: i32) -> (i32, i32, i32) {
    %c0_i32 = arith.constant 0 : i32
    %c0_i32_0 = arith.constant 0 : i32
    %c0_i32_1 = arith.constant 0 : i32
    return %arg0, %c0_i32, %c0_i32_0 : i32, i32, i32
  }
  func.func @transform_2(%arg0: i32) -> (i32, i32) {
    %c0_i32 = arith.constant 0 : i32
    %c0_i32_0 = arith.constant 0 : i32
    %c0_i32_1 = arith.constant 0 : i32
    return %c0_i32, %c0_i32_0 : i32, i32
  }
  func.func @transform_3(%arg0: i32) -> (i32, i32) {
    %c0_i32 = arith.constant 0 : i32
    %c0_i32_0 = arith.constant 0 : i32
    %c0_i32_1 = arith.constant 0 : i32
    return %c0_i32, %c0_i32_0 : i32, i32
  }
  func.func @transform_4(%arg0: i32) -> (i32, i32) {
    %c0_i32 = arith.constant 0 : i32
    %c0_i32_0 = arith.constant 0 : i32
    %c0_i32_1 = arith.constant 0 : i32
    return %c0_i32, %c0_i32_0 : i32, i32
  }
  func.func @transform_5(%arg0: i32) -> (i32, i32) {
    %c0_i32 = arith.constant 0 : i32
    %c0_i32_0 = arith.constant 0 : i32
    %c0_i32_1 = arith.constant 0 : i32
    return %c0_i32, %c0_i32_0 : i32, i32
  }
  func.func @transform_6(%arg0: i32) -> (i32, i32) {
    %c0_i32 = arith.constant 0 : i32
    %c0_i32_0 = arith.constant 0 : i32
    %c0_i32_1 = arith.constant 0 : i32
    return %c0_i32, %c0_i32_0 : i32, i32
  }
  func.func @transform_7(%arg0: i32) -> (i32, i32) {
    %c0_i32 = arith.constant 0 : i32
    %c0_i32_0 = arith.constant 0 : i32
    %c0_i32_1 = arith.constant 0 : i32
    return %c0_i32, %c0_i32_0 : i32, i32
  }
  func.func @transform_8(%arg0: i32) -> (i32, i32) {
    %c0_i32 = arith.constant 0 : i32
    %c0_i32_0 = arith.constant 0 : i32
    %c0_i32_1 = arith.constant 0 : i32
    return %c0_i32, %c0_i32_0 : i32, i32
  }
  func.func @transform_9(%arg0: i32) -> (i32, i32) {
    %c0_i32 = arith.constant 0 : i32
    %c0_i32_0 = arith.constant 0 : i32
    %c0_i32_1 = arith.constant 0 : i32
    return %c0_i32, %c0_i32_0 : i32, i32
  }
  func.func @transform_10(%arg0: i32) -> (i32, i32) {
    %c0_i32 = arith.constant 0 : i32
    %c0_i32_0 = arith.constant 0 : i32
    %c0_i32_1 = arith.constant 0 : i32
    return %c0_i32, %c0_i32_0 : i32, i32
  }
  func.func @transform_11(%arg0: i32) -> (i32, i32) {
    %c0_i32 = arith.constant 0 : i32
    %c0_i32_0 = arith.constant 0 : i32
    %c0_i32_1 = arith.constant 0 : i32
    return %c0_i32, %c0_i32_0 : i32, i32
  }
  func.func @transform_12(%arg0: i32) -> (i32, i32, i32) {
    %c0_i32 = arith.constant 0 : i32
    %c0_i32_0 = arith.constant 0 : i32
    %c0_i32_1 = arith.constant 0 : i32
    return %arg0, %c0_i32, %c0_i32_0 : i32, i32, i32
  }
}

</mosaic_0001>

<llo_original>
// kernel: tpu_custom_call.1
$region0: #{tpu_custom_call.1}
  #allocation0 [shape = 'u32[]', space=smem, size = 0x4, offset = 0x4, fixed_abs, tag = 'smem constant byte address 0x4 - core index']
  #allocation1 [shape = 'u32[144,128]{1,0:T(1,128)}', space=vmem, size = 0x12000, scoped, tag = 'internal scratch']
  %s0 = inlined_call_operand.hbm [shape: bf16[2,8,128], index: 0, kind: input, shape index: {}]
  %s1 = inlined_call_operand.hbm [shape: bf16[2,128,128], index: 1, kind: input, shape index: {}]
  %s2 = inlined_call_operand.hbm [shape: bf16[128,128], index: 2, kind: input, shape index: {}]
  %s3 = inlined_call_operand.vmem [shape: f32[1,128], index: 3, kind: input, shape index: {}]
  %s4 = inlined_call_operand.hbm [shape: bf16[128,128], index: 4, kind: input, shape index: {}]
  %s5 = inlined_call_operand.vmem [shape: f32[1,128], index: 5, kind: input, shape index: {}]
  %s6 = inlined_call_operand.hbm [shape: bf16[128,128], index: 6, kind: input, shape index: {}]
  %s7 = inlined_call_operand.vmem [shape: f32[1,128], index: 7, kind: input, shape index: {}]
  %s8 = inlined_call_operand.hbm [shape: bf16[128,128], index: 8, kind: input, shape index: {}]
  %s9 = inlined_call_operand.vmem [shape: f32[1,128], index: 9, kind: input, shape index: {}]
  %s10 = inlined_call_operand.hbm [shape: bf16[128,128], index: 10, kind: input, shape index: {}]
  %s11 = inlined_call_operand.vmem [shape: f32[1,128], index: 11, kind: input, shape index: {}]
  %s12 = inlined_call_operand.hbm [shape: f32[2,8,128], index: 12, kind: output, shape index: {}]
  %s13 = sld [smem:[#allocation0]]
  $region109: #{tpu_custom_call.1} parent=0
    _
  %s15 = ssub.s32 1, %s13
  %s16 = scalar_select 0, %s15, %s13
  $region1: #{tpu_custom_call.1} parent=0
    #allocation2 [shape = 'u8[4096]{0}', space=vmem, size = 0x1000, scoped, tag = 'input window, operand 0']
    #allocation3 [shape = 's32[2]{0}', space=sflag, size = 0x8, scoped, tag = 'scoped memory for tpu_custom_call.1']
    #allocation4 [shape = 's32[2]{0}', space=sflag, size = 0x8, scoped, tag = 'scoped memory for tpu_custom_call.1']
    #allocation5 [shape = 'u8[65536]{0}', space=vmem, size = 0x10000, scoped, tag = 'input window, operand 1']
    #allocation6 [shape = 's32[2]{0}', space=sflag, size = 0x8, scoped, tag = 'scoped memory for tpu_custom_call.1']
    #allocation7 [shape = 'u8[32768]{0}', space=vmem, size = 0x8000, scoped, tag = 'input window, operand 2, single buffered']
    #allocation8 [shape = 'u8[32768]{0}', space=vmem, size = 0x8000, scoped, tag = 'input window, operand 4, single buffered']
    #allocation9 [shape = 's32[1]{0}', space=sflag, size = 0x4, scoped, tag = 'scoped memory for tpu_custom_call.1']
    #allocation10 [shape = 'u8[32768]{0}', space=vmem, size = 0x8000, scoped, tag = 'input window, operand 6, single buffered']
    #allocation11 [shape = 'u8[32768]{0}', space=vmem, size = 0x8000, scoped, tag = 'input window, operand 8, single buffered']
    #allocation12 [shape = 's32[1]{0}', space=sflag, size = 0x4, scoped, tag = 'scoped memory for tpu_custom_call.1']
    #allocation13 [shape = 'u8[32768]{0}', space=vmem, size = 0x8000, scoped, tag = 'input window, operand 10, single buffered']
    #allocation14 [shape = 'u8[8192]{0}', space=vmem, size = 0x2000, scoped, tag = 'output window, operand 0']
    %17 = vsyncpa [#allocation3], 0
    %s18 = scalar_lea.sflag [#allocation3], 1
    %19 = vsyncpa %s18, 0
    %20 = vsyncpa [#allocation6], 0
    %s21 = scalar_lea.sflag [#allocation6], 1
    %22 = vsyncpa %s21, 0
    %23 = vsyncpa [#allocation9], 0
    %24 = vsyncpa [#allocation12], 0
    %25 = vsyncpa [#allocation4], 0
    %s26 = scalar_lea.sflag [#allocation4], 1
    %27 = vsyncpa %s26, 0
    loop: start=0, step=1, limit=4
    $region2: #{tpu_custom_call.1} parent=1 // loop_pre_header
      _
    $region3: #{tpu_custom_call.1} parent=1 // loop_header
      %s29 = sphi 0, %s33
      %p30 = scmp.ge.s32.totalorder %s29, 4
      %s39 = sphi 0, %s41
      %s42 = sphi 0, %s39
      %s43 = sphi 0, %s42
      %s59 = sphi 0, %s43
      %s65 = sphi 0, %s67
      %s68 = sphi 0, %s65
      %s69 = sphi 0, %s68
      %s85 = sphi 0, %s69
      %s89 = sphi 0, %s89
      %s91 = sphi 0, %s89
      %s92 = sphi 0, %s91
      %s106 = sphi 0, %s92
      %s110 = sphi 0, %s110
      %s112 = sphi 0, %s110
      %s113 = sphi 0, %s112
      %s127 = sphi 0, %s113
      %s131 = sphi 0, %s131
      %s133 = sphi 0, %s131
      %s134 = sphi 0, %s133
      %s148 = sphi 0, %s134
      %s152 = sphi 0, %s152
      %s154 = sphi 0, %s152
      %s155 = sphi 0, %s154
      %s169 = sphi 0, %s155
      %s173 = sphi 0, %s173
      %s175 = sphi 0, %s173
      %s176 = sphi 0, %s175
      %s190 = sphi 0, %s176
      %s194 = sphi 0, %s194
      %s196 = sphi 0, %s194
      %s197 = sphi 0, %s196
      %s211 = sphi 0, %s197
      %s215 = sphi 0, %s215
      %s217 = sphi 0, %s215
      %s218 = sphi 0, %s217
      %s232 = sphi 0, %s218
      %s236 = sphi 0, %s236
      %s238 = sphi 0, %s236
      %s239 = sphi 0, %s238
      %s253 = sphi 0, %s239
      %s257 = sphi 0, %s257
      %s259 = sphi 0, %s257
      %s260 = sphi 0, %s259
      %s274 = sphi 0, %s260
      %s278 = sphi 0, %s278
      %s280 = sphi 0, %s278
      %s281 = sphi 0, %s280
      %s295 = sphi 0, %s281
      %s301 = sphi 0, %s303
      %s304 = sphi 0, %s301
      %s305 = sphi 0, %s304
      %s321 = sphi 0, %s305
    $region4: #{tpu_custom_call.1} parent=1 // loop_header_branch
      %32 = sbr.rel (%p30) target = $region8
    $region5: #{tpu_custom_call.1} parent=1 // loop_body
      %s34 = ssub.s32 %s29, 1
      %s35 = ssub.s32 %s29, 2
      %s36 = sadd.s32 %s29, 1
      %s37 = ssub.s32 %s29, %s36
      %p38 = scmp.eq.s32.totalorder %s37, 0
      %s40 = sadd.s32 %s39, 1
      %s41 = scalar_select %p38, %s39, %s40
      %p44 = pneg %p38
      %p45 = scmp.eq.s32.totalorder %s29, 1
      %p46 = por %p44, %p45
      %p47 = scmp.ne.s32.totalorder %s39, %s42
      %p48 = scmp.eq.s32.totalorder %s29, 0
      %p49 = por %p47, %p48
      %p50 = scmp.ne.s32.totalorder %s39, %s42
      %p51 = scmp.eq.s32.totalorder %s34, 1
      %p52 = por %p50, %p51
      %p53 = scmp.ne.s32.totalorder %s42, %s43
      %p54 = scmp.eq.s32.totalorder %s34, 0
      %p55 = por %p53, %p54
      %p56 = scmp.ne.s32.totalorder %s42, %s43
      %p57 = scmp.eq.s32.totalorder %s35, 1
      %p58 = por %p56, %p57
      %p60 = scmp.ne.s32.totalorder %s43, %s59
      %p61 = scmp.eq.s32.totalorder %s35, 0
      %p62 = por %p60, %p61
      %s63 = ssub.s32 %s29, %s36
      %p64 = scmp.eq.s32.totalorder %s63, 0
      %s66 = sadd.s32 %s65, 1
      %s67 = scalar_select %p64, %s65, %s66
      %p70 = pneg %p64
      %p71 = scmp.eq.s32.totalorder %s29, 1
      %p72 = por %p70, %p71
      %p73 = scmp.ne.s32.totalorder %s65, %s68
      %p74 = scmp.eq.s32.totalorder %s29, 0
      %p75 = por %p73, %p74
      %p76 = scmp.ne.s32.totalorder %s65, %s68
      %p77 = scmp.eq.s32.totalorder %s34, 1
      %p78 = por %p76, %p77
      %p79 = scmp.ne.s32.totalorder %s68, %s69
      %p80 = scmp.eq.s32.totalorder %s34, 0
      %p81 = por %p79, %p80
      %p82 = scmp.ne.s32.totalorder %s68, %s69
      %p83 = scmp.eq.s32.totalorder %s35, 1
      %p84 = por %p82, %p83
      %p86 = scmp.ne.s32.totalorder %s69, %s85
      %p87 = scmp.eq.s32.totalorder %s35, 0
      %p88 = por %p86, %p87
      %s90 = sadd.s32 %s89, 1
      %p93 = scmp.eq.s32.totalorder %s29, 1
      %p94 = scmp.ne.s32.totalorder %s89, %s91
      %p95 = scmp.eq.s32.totalorder %s29, 0
      %p96 = por %p94, %p95
      %p97 = scmp.ne.s32.totalorder %s89, %s91
      %p98 = scmp.eq.s32.totalorder %s34, 1
      %p99 = por %p97, %p98
      %p100 = scmp.ne.s32.totalorder %s91, %s92
      %p101 = scmp.eq.s32.totalorder %s34, 0
      %p102 = por %p100, %p101
      %p103 = scmp.ne.s32.totalorder %s91, %s92
      %p104 = scmp.eq.s32.totalorder %s35, 1
      %p105 = por %p103, %p104
      %p107 = scmp.ne.s32.totalorder %s92, %s106
      %p108 = scmp.eq.s32.totalorder %s35, 0
      %p109 = por %p107, %p108
      %s111 = sadd.s32 %s110, 1
      %p114 = scmp.eq.s32.totalorder %s29, 1
      %p115 = scmp.ne.s32.totalorder %s110, %s112
      %p116 = scmp.eq.s32.totalorder %s29, 0
      %p117 = por %p115, %p116
      %p118 = scmp.ne.s32.totalorder %s110, %s112
      %p119 = scmp.eq.s32.totalorder %s34, 1
      %p120 = por %p118, %p119
      %p121 = scmp.ne.s32.totalorder %s112, %s113
      %p122 = scmp.eq.s32.totalorder %s34, 0
      %p123 = por %p121, %p122
      %p124 = scmp.ne.s32.totalorder %s112, %s113
      %p125 = scmp.eq.s32.totalorder %s35, 1
      %p126 = por %p124, %p125
      %p128 = scmp.ne.s32.totalorder %s113, %s127
      %p129 = scmp.eq.s32.totalorder %s35, 0
      %p130 = por %p128, %p129
      %s132 = sadd.s32 %s131, 1
      %p135 = scmp.eq.s32.totalorder %s29, 1
      %p136 = scmp.ne.s32.totalorder %s131, %s133
      %p137 = scmp.eq.s32.totalorder %s29, 0
      %p138 = por %p136, %p137
      %p139 = scmp.ne.s32.totalorder %s131, %s133
      %p140 = scmp.eq.s32.totalorder %s34, 1
      %p141 = por %p139, %p140
      %p142 = scmp.ne.s32.totalorder %s133, %s134
      %p143 = scmp.eq.s32.totalorder %s34, 0
      %p144 = por %p142, %p143
      %p145 = scmp.ne.s32.totalorder %s133, %s134
      %p146 = scmp.eq.s32.totalorder %s35, 1
      %p147 = por %p145, %p146
      %p149 = scmp.ne.s32.totalorder %s134, %s148
      %p150 = scmp.eq.s32.totalorder %s35, 0
      %p151 = por %p149, %p150
      %s153 = sadd.s32 %s152, 1
      %p156 = scmp.eq.s32.totalorder %s29, 1
      %p157 = scmp.ne.s32.totalorder %s152, %s154
      %p158 = scmp.eq.s32.totalorder %s29, 0
      %p159 = por %p157, %p158
      %p160 = scmp.ne.s32.totalorder %s152, %s154
      %p161 = scmp.eq.s32.totalorder %s34, 1
      %p162 = por %p160, %p161
      %p163 = scmp.ne.s32.totalorder %s154, %s155
      %p164 = scmp.eq.s32.totalorder %s34, 0
      %p165 = por %p163, %p164
      %p166 = scmp.ne.s32.totalorder %s154, %s155
      %p167 = scmp.eq.s32.totalorder %s35, 1
      %p168 = por %p166, %p167
      %p170 = scmp.ne.s32.totalorder %s155, %s169
      %p171 = scmp.eq.s32.totalorder %s35, 0
      %p172 = por %p170, %p171
      %s174 = sadd.s32 %s173, 1
      %p177 = scmp.eq.s32.totalorder %s29, 1
      %p178 = scmp.ne.s32.totalorder %s173, %s175
      %p179 = scmp.eq.s32.totalorder %s29, 0
      %p180 = por %p178, %p179
      %p181 = scmp.ne.s32.totalorder %s173, %s175
      %p182 = scmp.eq.s32.totalorder %s34, 1
      %p183 = por %p181, %p182
      %p184 = scmp.ne.s32.totalorder %s175, %s176
      %p185 = scmp.eq.s32.totalorder %s34, 0
      %p186 = por %p184, %p185
      %p187 = scmp.ne.s32.totalorder %s175, %s176
      %p188 = scmp.eq.s32.totalorder %s35, 1
      %p189 = por %p187, %p188
      %p191 = scmp.ne.s32.totalorder %s176, %s190
      %p192 = scmp.eq.s32.totalorder %s35, 0
      %p193 = por %p191, %p192
      %s195 = sadd.s32 %s194, 1
      %p198 = scmp.eq.s32.totalorder %s29, 1
      %p199 = scmp.ne.s32.totalorder %s194, %s196
      %p200 = scmp.eq.s32.totalorder %s29, 0
      %p201 = por %p199, %p200
      %p202 = scmp.ne.s32.totalorder %s194, %s196
      %p203 = scmp.eq.s32.totalorder %s34, 1
      %p204 = por %p202, %p203
      %p205 = scmp.ne.s32.totalorder %s196, %s197
      %p206 = scmp.eq.s32.totalorder %s34, 0
      %p207 = por %p205, %p206
      %p208 = scmp.ne.s32.totalorder %s196, %s197
      %p209 = scmp.eq.s32.totalorder %s35, 1
      %p210 = por %p208, %p209
      %p212 = scmp.ne.s32.totalorder %s197, %s211
      %p213 = scmp.eq.s32.totalorder %s35, 0
      %p214 = por %p212, %p213
      %s216 = sadd.s32 %s215, 1
      %p219 = scmp.eq.s32.totalorder %s29, 1
      %p220 = scmp.ne.s32.totalorder %s215, %s217
      %p221 = scmp.eq.s32.totalorder %s29, 0
      %p222 = por %p220, %p221
      %p223 = scmp.ne.s32.totalorder %s215, %s217
      %p224 = scmp.eq.s32.totalorder %s34, 1
      %p225 = por %p223, %p224
      %p226 = scmp.ne.s32.totalorder %s217, %s218
      %p227 = scmp.eq.s32.totalorder %s34, 0
      %p228 = por %p226, %p227
      %p229 = scmp.ne.s32.totalorder %s217, %s218
      %p230 = scmp.eq.s32.totalorder %s35, 1
      %p231 = por %p229, %p230
      %p233 = scmp.ne.s32.totalorder %s218, %s232
      %p234 = scmp.eq.s32.totalorder %s35, 0
      %p235 = por %p233, %p234
      %s237 = sadd.s32 %s236, 1
      %p240 = scmp.eq.s32.totalorder %s29, 1
      %p241 = scmp.ne.s32.totalorder %s236, %s238
      %p242 = scmp.eq.s32.totalorder %s29, 0
      %p243 = por %p241, %p242
      %p244 = scmp.ne.s32.totalorder %s236, %s238
      %p245 = scmp.eq.s32.totalorder %s34, 1
      %p246 = por %p244, %p245
      %p247 = scmp.ne.s32.totalorder %s238, %s239
      %p248 = scmp.eq.s32.totalorder %s34, 0
      %p249 = por %p247, %p248
      %p250 = scmp.ne.s32.totalorder %s238, %s239
      %p251 = scmp.eq.s32.totalorder %s35, 1
      %p252 = por %p250, %p251
      %p254 = scmp.ne.s32.totalorder %s239, %s253
      %p255 = scmp.eq.s32.totalorder %s35, 0
      %p256 = por %p254, %p255
      %s258 = sadd.s32 %s257, 1
      %p261 = scmp.eq.s32.totalorder %s29, 1
      %p262 = scmp.ne.s32.totalorder %s257, %s259
      %p263 = scmp.eq.s32.totalorder %s29, 0
      %p264 = por %p262, %p263
      %p265 = scmp.ne.s32.totalorder %s257, %s259
      %p266 = scmp.eq.s32.totalorder %s34, 1
      %p267 = por %p265, %p266
      %p268 = scmp.ne.s32.totalorder %s259, %s260
      %p269 = scmp.eq.s32.totalorder %s34, 0
      %p270 = por %p268, %p269
      %p271 = scmp.ne.s32.totalorder %s259, %s260
      %p272 = scmp.eq.s32.totalorder %s35, 1
      %p273 = por %p271, %p272
      %p275 = scmp.ne.s32.totalorder %s260, %s274
      %p276 = scmp.eq.s32.totalorder %s35, 0
      %p277 = por %p275, %p276
      %s279 = sadd.s32 %s278, 1
      %p282 = scmp.eq.s32.totalorder %s29, 1
      %p283 = scmp.ne.s32.totalorder %s278, %s280
      %p284 = scmp.eq.s32.totalorder %s29, 0
      %p285 = por %p283, %p284
      %p286 = scmp.ne.s32.totalorder %s278, %s280
      %p287 = scmp.eq.s32.totalorder %s34, 1
      %p288 = por %p286, %p287
      %p289 = scmp.ne.s32.totalorder %s280, %s281
      %p290 = scmp.eq.s32.totalorder %s34, 0
      %p291 = por %p289, %p290
      %p292 = scmp.ne.s32.totalorder %s280, %s281
      %p293 = scmp.eq.s32.totalorder %s35, 1
      %p294 = por %p292, %p293
      %p296 = scmp.ne.s32.totalorder %s281, %s295
      %p297 = scmp.eq.s32.totalorder %s35, 0
      %p298 = por %p296, %p297
      %s299 = ssub.s32 %s29, %s36
      %p300 = scmp.eq.s32.totalorder %s299, 0
      %s302 = sadd.s32 %s301, 1
      %s303 = scalar_select %p300, %s301, %s302
      %p306 = pneg %p300
      %p307 = scmp.eq.s32.totalorder %s29, 1
      %p308 = por %p306, %p307
      %p309 = scmp.ne.s32.totalorder %s301, %s304
      %p310 = scmp.eq.s32.totalorder %s29, 0
      %p311 = por %p309, %p310
      %p312 = scmp.ne.s32.totalorder %s301, %s304
      %p313 = scmp.eq.s32.totalorder %s34, 1
      %p314 = por %p312, %p313
      %p315 = scmp.ne.s32.totalorder %s304, %s305
      %p316 = scmp.eq.s32.totalorder %s34, 0
      %p317 = por %p315, %p316
      %p318 = scmp.ne.s32.totalorder %s304, %s305
      %p319 = scmp.eq.s32.totalorder %s35, 1
      %p320 = por %p318, %p319
      %p322 = scmp.ne.s32.totalorder %s305, %s321
      %p323 = scmp.eq.s32.totalorder %s35, 0
      %p324 = por %p322, %p323
      %p325 = scmp.le.s32.totalorder 1, %s29
      %p326 = scmp.lt.s32.totalorder %s29, 3
      %p327 = pnand %p325, %p326
      %p328 = pneg %p327
      // Predicated region
      $region9: #{tpu_custom_call.1} parent=5 // pred_check
        _
      $region10: #{tpu_custom_call.1} parent=5 // pred_check_branch
        %330 = sbr.rel (%p327) target = $region12
      $region11: #{tpu_custom_call.1} parent=5 // pred_region
        %s331 = ssub.s32 %s29, 1
        // Predicated region
        $region13: #{tpu_custom_call.1} parent=11 // pred_check
          %p332 = pneg %p102
        $region14: #{tpu_custom_call.1} parent=11 // pred_check_branch
          %334 = sbr.rel (%p332) target = $region16
        $region15: #{tpu_custom_call.1} parent=11 // pred_region
          %s336 = ssub.s32 1024, 1024
          %337 = vsyncadd [#allocation6], %s336
          %s338 = sshll.u32 [#allocation7], 4
          %s339 = int_to_ptr.vmem [resolvable:$true] %s338
          %344 = dma.hbm_to_vmem [thread:$0]  %s2, 1024, %s339, [#allocation6], 64, 64, 4
        $region16: #{tpu_custom_call.1} parent=11 // pred_fallthru
          _
        // Predicated region
        $region17: #{tpu_custom_call.1} parent=11 // pred_check
          %p345 = pneg %p123
        $region18: #{tpu_custom_call.1} parent=11 // pred_check_branch
          %347 = sbr.rel (%p345) target = $region20
        $region19: #{tpu_custom_call.1} parent=11 // pred_region
          _
        $region20: #{tpu_custom_call.1} parent=11 // pred_fallthru
          _
        // Predicated region
        $region21: #{tpu_custom_call.1} parent=11 // pred_check
          %p348 = pneg %p144
        $region22: #{tpu_custom_call.1} parent=11 // pred_check_branch
          %350 = sbr.rel (%p348) target = $region24
        $region23: #{tpu_custom_call.1} parent=11 // pred_region
          %s352 = ssub.s32 1024, 1024
          %353 = vsyncadd [#allocation9], %s352
          %s354 = sshll.u32 [#allocation8], 4
          %s355 = int_to_ptr.vmem [resolvable:$true] %s354
          %360 = dma.hbm_to_vmem [thread:$0]  %s4, 1024, %s355, [#allocation9], 64, 64, 4
        $region24: #{tpu_custom_call.1} parent=11 // pred_fallthru
          _
        // Predicated region
        $region25: #{tpu_custom_call.1} parent=11 // pred_check
          %p361 = pneg %p165
        $region26: #{tpu_custom_call.1} parent=11 // pred_check_branch
          %363 = sbr.rel (%p361) target = $region28
        $region27: #{tpu_custom_call.1} parent=11 // pred_region
          _
        $region28: #{tpu_custom_call.1} parent=11 // pred_fallthru
          _
        // Predicated region
        $region29: #{tpu_custom_call.1} parent=11 // pred_check
          %p364 = pneg %p186
        $region30: #{tpu_custom_call.1} parent=11 // pred_check_branch
          %366 = sbr.rel (%p364) target = $region32
        $region31: #{tpu_custom_call.1} parent=11 // pred_region
          %s368 = ssub.s32 1024, 1024
          %369 = vsyncadd [#allocation9], %s368
          %s370 = sshll.u32 [#allocation10], 4
          %s371 = int_to_ptr.vmem [resolvable:$true] %s370
          %376 = dma.hbm_to_vmem [thread:$0]  %s6, 1024, %s371, [#allocation9], 64, 64, 4
        $region32: #{tpu_custom_call.1} parent=11 // pred_fallthru
          _
        // Predicated region
        $region33: #{tpu_custom_call.1} parent=11 // pred_check
          %p377 = pneg %p207
        $region34: #{tpu_custom_call.1} parent=11 // pred_check_branch
          %379 = sbr.rel (%p377) target = $region36
        $region35: #{tpu_custom_call.1} parent=11 // pred_region
          _
        $region36: #{tpu_custom_call.1} parent=11 // pred_fallthru
          _
        // Predicated region
        $region37: #{tpu_custom_call.1} parent=11 // pred_check
          %p380 = pneg %p228
        $region38: #{tpu_custom_call.1} parent=11 // pred_check_branch
          %382 = sbr.rel (%p380) target = $region40
        $region39: #{tpu_custom_call.1} parent=11 // pred_region
          %s384 = ssub.s32 1024, 1024
          %385 = vsyncadd [#allocation12], %s384
          %s386 = sshll.u32 [#allocation11], 4
          %s387 = int_to_ptr.vmem [resolvable:$true] %s386
          %392 = dma.hbm_to_vmem [thread:$0]  %s8, 1024, %s387, [#allocation12], 64, 64, 4
        $region40: #{tpu_custom_call.1} parent=11 // pred_fallthru
          _
        // Predicated region
        $region41: #{tpu_custom_call.1} parent=11 // pred_check
          %p393 = pneg %p249
        $region42: #{tpu_custom_call.1} parent=11 // pred_check_branch
          %395 = sbr.rel (%p393) target = $region44
        $region43: #{tpu_custom_call.1} parent=11 // pred_region
          _
        $region44: #{tpu_custom_call.1} parent=11 // pred_fallthru
          _
        // Predicated region
        $region45: #{tpu_custom_call.1} parent=11 // pred_check
          %p396 = pneg %p270
        $region46: #{tpu_custom_call.1} parent=11 // pred_check_branch
          %398 = sbr.rel (%p396) target = $region48
        $region47: #{tpu_custom_call.1} parent=11 // pred_region
          %s400 = ssub.s32 1024, 1024
          %401 = vsyncadd [#allocation12], %s400
          %s402 = sshll.u32 [#allocation13], 4
          %s403 = int_to_ptr.vmem [resolvable:$true] %s402
          %408 = dma.hbm_to_vmem [thread:$0]  %s10, 1024, %s403, [#allocation12], 64, 64, 4
        $region48: #{tpu_custom_call.1} parent=11 // pred_fallthru
          _
        // Predicated region
        $region49: #{tpu_custom_call.1} parent=11 // pred_check
          %p409 = pneg %p291
        $region50: #{tpu_custom_call.1} parent=11 // pred_check_branch
          %411 = sbr.rel (%p409) target = $region52
        $region51: #{tpu_custom_call.1} parent=11 // pred_region
          _
        $region52: #{tpu_custom_call.1} parent=11 // pred_fallthru
          _
      $region12: #{tpu_custom_call.1} parent=5 // pred_fallthru
        _
      %p412 = scmp.lt.s32.totalorder %s29, 2
      // Predicated region
      $region53: #{tpu_custom_call.1} parent=5 // pred_check
        %p413 = pneg %p412
      $region54: #{tpu_custom_call.1} parent=5 // pred_check_branch
        %415 = sbr.rel (%p413) target = $region56
      $region55: #{tpu_custom_call.1} parent=5 // pred_region
        // Predicated region
        $region57: #{tpu_custom_call.1} parent=55 // pred_check
          %p416 = pneg %p49
        $region58: #{tpu_custom_call.1} parent=55 // pred_check_branch
          %418 = sbr.rel (%p416) target = $region60
        $region59: #{tpu_custom_call.1} parent=55 // pred_region
          %s419 = sand.u32 %s39, 1
          %s420 = scalar_lea.sflag [#allocation3], %s419
          %s421 = sand.u32 %s39, 1
          %s422 = smul.addr %s421, 4
          %s423 = scalar_lea.vmem [#allocation2], %s422
          %s425 = ssub.s32 64, 64
          %426 = vsyncadd %s420, %s425
          %s427 = smul.addr %s29, 64
          %s428 = scalar_lea.hbm %s0, %s427
          %s430 = sshll.u32 %s423, 4
          %s431 = int_to_ptr.vmem [resolvable:$true] %s430
          %433 = dma.hbm_to_vmem [thread:$0]  %s428, 64, %s431, %s420
        $region60: #{tpu_custom_call.1} parent=55 // pred_fallthru
          _
        // Predicated region
        $region61: #{tpu_custom_call.1} parent=55 // pred_check
          %p434 = pneg %p75
        $region62: #{tpu_custom_call.1} parent=55 // pred_check_branch
          %436 = sbr.rel (%p434) target = $region64
        $region63: #{tpu_custom_call.1} parent=55 // pred_region
          %s437 = sand.u32 %s29, 1
          %s438 = scalar_lea.sflag [#allocation6], %s437
          %s439 = sand.u32 %s65, 1
          %s440 = smul.addr %s439, 64
          %s441 = scalar_lea.vmem [#allocation5], %s440
          %s443 = ssub.s32 1024, 1024
          %444 = vsyncadd %s438, %s443
          %s445 = smul.addr %s29, 16
          %s446 = smul.addr %s445, 64
          %s447 = scalar_lea.hbm %s1, %s446
          %s448 = sshll.u32 %s441, 4
          %s449 = int_to_ptr.vmem [resolvable:$true] %s448
          %454 = dma.hbm_to_vmem [thread:$0]  %s447, 1024, %s449, %s438, 64, 64, 4
        $region64: #{tpu_custom_call.1} parent=55 // pred_fallthru
          _
      $region56: #{tpu_custom_call.1} parent=5 // pred_fallthru
        _
      %p455 = scmp.le.s32.totalorder 1, %s29
      %p456 = scmp.lt.s32.totalorder %s29, 3
      %p457 = pnand %p455, %p456
      %p458 = pneg %p457
      // Predicated region
      $region65: #{tpu_custom_call.1} parent=5 // pred_check
        _
      $region66: #{tpu_custom_call.1} parent=5 // pred_check_branch
        %460 = sbr.rel (%p457) target = $region68
      $region67: #{tpu_custom_call.1} parent=5 // pred_region
        %s461 = ssub.s32 %s29, 1
        %s462 = sand.u32 %s42, 1
        %s463 = scalar_lea.sflag [#allocation3], %s462
        %s464 = sand.u32 %s42, 1
        %s465 = smul.addr %s464, 4
        %s466 = scalar_lea.vmem [#allocation2], %s465
        // Predicated region
        $region69: #{tpu_custom_call.1} parent=67 // pred_check
          %p467 = pneg %p55
        $region70: #{tpu_custom_call.1} parent=67 // pred_check_branch
          %469 = sbr.rel (%p467) target = $region72
        $region71: #{tpu_custom_call.1} parent=67 // pred_region
          %470 = dma.done %s463, 64
        $region72: #{tpu_custom_call.1} parent=67 // pred_fallthru
          _
        %s471 = sand.u32 %s34, 1
        %s472 = scalar_lea.sflag [#allocation6], %s471
        %s473 = sand.u32 %s68, 1
        %s474 = smul.addr %s473, 64
        %s475 = scalar_lea.vmem [#allocation5], %s474
        // Predicated region
        $region73: #{tpu_custom_call.1} parent=67 // pred_check
          %p476 = pneg %p81
        $region74: #{tpu_custom_call.1} parent=67 // pred_check_branch
          %478 = sbr.rel (%p476) target = $region76
        $region75: #{tpu_custom_call.1} parent=67 // pred_region
          %479 = dma.done %s472, 1024
        $region76: #{tpu_custom_call.1} parent=67 // pred_fallthru
          _
        // Predicated region
        $region77: #{tpu_custom_call.1} parent=67 // pred_check
          %p480 = pneg %p102
        $region78: #{tpu_custom_call.1} parent=67 // pred_check_branch
          %482 = sbr.rel (%p480) target = $region80
        $region79: #{tpu_custom_call.1} parent=67 // pred_region
          %483 = dma.done [#allocation6], 1024
        $region80: #{tpu_custom_call.1} parent=67 // pred_fallthru
          _
        // Predicated region
        $region81: #{tpu_custom_call.1} parent=67 // pred_check
          %p484 = pneg %p144
        $region82: #{tpu_custom_call.1} parent=67 // pred_check_branch
          %486 = sbr.rel (%p484) target = $region84
        $region83: #{tpu_custom_call.1} parent=67 // pred_region
          %487 = dma.done [#allocation9], 1024
        $region84: #{tpu_custom_call.1} parent=67 // pred_fallthru
          _
        // Predicated region
        $region85: #{tpu_custom_call.1} parent=67 // pred_check
          %p488 = pneg %p186
        $region86: #{tpu_custom_call.1} parent=67 // pred_check_branch
          %490 = sbr.rel (%p488) target = $region88
        $region87: #{tpu_custom_call.1} parent=67 // pred_region
          %491 = dma.done [#allocation9], 1024
        $region88: #{tpu_custom_call.1} parent=67 // pred_fallthru
          _
        // Predicated region
        $region89: #{tpu_custom_call.1} parent=67 // pred_check
          %p492 = pneg %p228
        $region90: #{tpu_custom_call.1} parent=67 // pred_check_branch
          %494 = sbr.rel (%p492) target = $region92
        $region91: #{tpu_custom_call.1} parent=67 // pred_region
          %495 = dma.done [#allocation12], 1024
        $region92: #{tpu_custom_call.1} parent=67 // pred_fallthru
          _
        // Predicated region
        $region93: #{tpu_custom_call.1} parent=67 // pred_check
          %p496 = pneg %p270
        $region94: #{tpu_custom_call.1} parent=67 // pred_check_branch
          %498 = sbr.rel (%p496) target = $region96
        $region95: #{tpu_custom_call.1} parent=67 // pred_region
          %499 = dma.done [#allocation12], 1024
        $region96: #{tpu_custom_call.1} parent=67 // pred_fallthru
          _
        %s500 = sand.u32 %s42, 1
        %s501 = scalar_lea.sflag [#allocation3], %s500
        %s502 = sand.u32 %s42, 1
        %s503 = smul.addr %s502, 4
        %s504 = scalar_lea.vmem [#allocation2], %s503
        %p505 = pneg %p55
        %p506 = pneg %p52
        %s507 = sand.u32 %s34, 1
        %s508 = scalar_lea.sflag [#allocation6], %s507
        %s509 = sand.u32 %s68, 1
        %s510 = smul.addr %s509, 64
        %s511 = scalar_lea.vmem [#allocation5], %s510
        %p512 = pneg %p81
        %p513 = pneg %p78
        %p514 = pneg %p102
        %p515 = pneg %p99
        %p516 = pneg %p123
        %p517 = pneg %p120
        %p518 = pneg %p144
        %p519 = pneg %p141
        %p520 = pneg %p165
        %p521 = pneg %p162
        %p522 = pneg %p186
        %p523 = pneg %p183
        %p524 = pneg %p207
        %p525 = pneg %p204
        %p526 = pneg %p228
        %p527 = pneg %p225
        %p528 = pneg %p249
        %p529 = pneg %p246
        %p530 = pneg %p270
        %p531 = pneg %p267
        %p532 = pneg %p291
        %p533 = pneg %p288
        %p534 = pneg %p317
        %p535 = pneg %p314
        %s536 = sand.u32 %s304, 1
        %s537 = scalar_lea.sflag [#allocation4], %s536
        %s538 = sand.u32 %s304, 1
        %s539 = smul.addr %s538, 8
        %s540 = scalar_lea.vmem [#allocation14], %s539
        %v542 = vld [vmem:[%s466] sm:$0xf]
        %v543 = vunpack.c.l.bf16 %v542
        %v544 = vld [vmem:[%s475] sm:$0xf]
        %v545 = vld [vmem:[%s475 + $0x4] sm:$0xf]
        %v546 = vld [vmem:[%s475 + $0x8] sm:$0xf]
        %v547 = vld [vmem:[%s475 + $0xc] sm:$0xf]
        %v548 = vld [vmem:[%s475 + $0x10] sm:$0xf]
        %v549 = vld [vmem:[%s475 + $0x14] sm:$0xf]
        %v550 = vld [vmem:[%s475 + $0x18] sm:$0xf]
        %v551 = vld [vmem:[%s475 + $0x1c] sm:$0xf]
        %v552 = vld [vmem:[%s475 + $0x20] sm:$0xf]
        %v553 = vld [vmem:[%s475 + $0x24] sm:$0xf]
        %v554 = vld [vmem:[%s475 + $0x28] sm:$0xf]
        %v555 = vld [vmem:[%s475 + $0x2c] sm:$0xf]
        %v556 = vld [vmem:[%s475 + $0x30] sm:$0xf]
        %v557 = vld [vmem:[%s475 + $0x34] sm:$0xf]
        %v558 = vld [vmem:[%s475 + $0x38] sm:$0xf]
        %v559 = vld [vmem:[%s475 + $0x3c] sm:$0xf]
        %v560 = vld [vmem:[%s3] sm:$0x1]
        %v561 = vld [vmem:[%s5] sm:$0x1]
        %v562 = vld [vmem:[%s7] sm:$0x1]
        %v563 = vld [vmem:[%s9] sm:$0x1]
        %v564 = vld [vmem:[%s11] sm:$0x1]
        %v565 = vld [vmem:[#allocation7] sm:$0xf]
        %v566 = vld [vmem:[#allocation7 + $0x4] sm:$0xf]
        %v567 = vld [vmem:[#allocation7 + $0x8] sm:$0xf]
        %v568 = vld [vmem:[#allocation7 + $0xc] sm:$0xf]
        %v569 = vld [vmem:[#allocation7 + $0x10] sm:$0xf]
        %v570 = vld [vmem:[#allocation7 + $0x14] sm:$0xf]
        %v571 = vld [vmem:[#allocation7 + $0x18] sm:$0xf]
        %v572 = vld [vmem:[#allocation7 + $0x1c] sm:$0xf]
        %v573 = vld [vmem:[#allocation7 + $0x20] sm:$0xf]
        %v574 = vld [vmem:[#allocation7 + $0x24] sm:$0xf]
        %v575 = vld [vmem:[#allocation7 + $0x28] sm:$0xf]
        %v576 = vld [vmem:[#allocation7 + $0x2c] sm:$0xf]
        %v577 = vld [vmem:[#allocation7 + $0x30] sm:$0xf]
        %v578 = vld [vmem:[#allocation7 + $0x34] sm:$0xf]
        %v579 = vld [vmem:[#allocation7 + $0x38] sm:$0xf]
        %v580 = vld [vmem:[#allocation7 + $0x3c] sm:$0xf]
        %v582 = vlaneseq
        %v583 = vshrl.u32 %v582, 7
        %v584 = vsub.s32 0, %v583
        %v585 = vrot.slane %v560, %v584
        %v603 = vunpack.c.l.b16 %v565
        %v604 = vunpack.c.l.b16 %v566
        %v605 = vunpack.c.l.b16 %v567
        %v606 = vunpack.c.l.b16 %v568
        %v607 = vunpack.c.l.b16 %v569
        %v608 = vunpack.c.l.b16 %v570
        %v609 = vunpack.c.l.b16 %v571
        %v610 = vunpack.c.l.b16 %v572
        %v611 = vunpack.c.l.b16 %v573
        %v612 = vunpack.c.l.b16 %v574
        %v613 = vunpack.c.l.b16 %v575
        %v614 = vunpack.c.l.b16 %v576
        %v615 = vunpack.c.l.b16 %v577
        %v616 = vunpack.c.l.b16 %v578
        %v617 = vunpack.c.l.b16 %v579
        %v618 = vunpack.c.l.b16 %v580
        %v619 = vpack.c.b16 %v604, %v603
        %v620 = vpack.c.b16 %v606, %v605
        %v621 = vpack.c.b16 %v608, %v607
        %v622 = vpack.c.b16 %v610, %v609
        %v623 = vpack.c.b16 %v612, %v611
        %v624 = vpack.c.b16 %v614, %v613
        %v625 = vpack.c.b16 %v616, %v615
        %v626 = vpack.c.b16 %v618, %v617
        %635 = vmatprep.subr.bf16.mxu0 0
        %636 = vmatpush1.bf16.msra.mxu0 %v619
        %637 = vmatprep.subr.bf16.mxu0 0
        %638 = vmatpush1.bf16.msra.mxu0 %v620
        %639 = vmatprep.subr.bf16.mxu0 0
        %640 = vmatpush1.bf16.msra.mxu0 %v621
        %641 = vmatprep.subr.bf16.mxu0 0
        %642 = vmatpush1.bf16.msra.mxu0 %v622
        %643 = vmatprep.subr.bf16.mxu0 0
        %644 = vmatpush1.bf16.msra.mxu0 %v623
        %645 = vmatprep.subr.bf16.mxu0 0
        %646 = vmatpush1.bf16.msra.mxu0 %v624
        %647 = vmatprep.subr.bf16.mxu0 0
        %648 = vmatpush1.bf16.msra.mxu0 %v625
        %649 = vmatprep.subr.bf16.mxu0 0
        %650 = vmatpush1.bf16.msra.mxu0 %v626
        %651 = vmatprep.subr.bf16.mxu0 0
        %652 = vmatpush1.bf16.msra.mxu0 0
        %653 = vmatprep.subr.bf16.mxu0 0
        %654 = vmatpush1.bf16.msra.mxu0 0
        %655 = vmatprep.subr.bf16.mxu0 0
        %656 = vmatpush1.bf16.msra.mxu0 0
        %657 = vmatprep.subr.bf16.mxu0 0
        %658 = vmatpush1.bf16.msra.mxu0 0
        %659 = vmatprep.subr.bf16.mxu0 0
        %660 = vmatpush1.bf16.msra.mxu0 0
        %661 = vmatprep.subr.bf16.mxu0 0
        %662 = vmatpush1.bf16.msra.mxu0 0
        %663 = vmatprep.subr.bf16.mxu0 0
        %664 = vmatpush1.bf16.msra.mxu0 0
        %665 = vmatprep.subr.bf16.mxu0 0
        %666 = vmatpush1.bf16.msra.mxu0 0
        %667 = vmatprep.mubr.bf16.mxu0 0
        %668 = vmatmul.mubr.bf16.gmra.mrb[0].mxu0 %v542
        %v669 = vpop.f32.mrb[0].mxu0
        %v670 = vadd.f32 %v585, %v669
        %v671 = vpop.f32.mrb[0].mxu0
        %v672 = vpop.f32.mrb[0].mxu0
        %v673 = vpop.f32.mrb[0].mxu0
        %674 = vdwg.mxu0
        %v675 = vld [vmem:[#allocation8] sm:$0xf]
        %v676 = vld [vmem:[#allocation8 + $0x4] sm:$0xf]
        %v677 = vld [vmem:[#allocation8 + $0x8] sm:$0xf]
        %v678 = vld [vmem:[#allocation8 + $0xc] sm:$0xf]
        %v679 = vld [vmem:[#allocation8 + $0x10] sm:$0xf]
        %v680 = vld [vmem:[#allocation8 + $0x14] sm:$0xf]
        %v681 = vld [vmem:[#allocation8 + $0x18] sm:$0xf]
        %v682 = vld [vmem:[#allocation8 + $0x1c] sm:$0xf]
        %v683 = vld [vmem:[#allocation8 + $0x20] sm:$0xf]
        %v684 = vld [vmem:[#allocation8 + $0x24] sm:$0xf]
        %v685 = vld [vmem:[#allocation8 + $0x28] sm:$0xf]
        %v686 = vld [vmem:[#allocation8 + $0x2c] sm:$0xf]
        %v687 = vld [vmem:[#allocation8 + $0x30] sm:$0xf]
        %v688 = vld [vmem:[#allocation8 + $0x34] sm:$0xf]
        %v689 = vld [vmem:[#allocation8 + $0x38] sm:$0xf]
        %v690 = vld [vmem:[#allocation8 + $0x3c] sm:$0xf]
        %v692 = vlaneseq
        %v693 = vshrl.u32 %v692, 7
        %v694 = vsub.s32 0, %v693
        %v695 = vrot.slane %v561, %v694
        %v713 = vunpack.c.l.b16 %v544
        %v714 = vunpack.c.l.b16 %v545
        %v715 = vunpack.c.l.b16 %v546
        %v716 = vunpack.c.l.b16 %v547
        %v717 = vunpack.c.l.b16 %v548
        %v718 = vunpack.c.l.b16 %v549
        %v719 = vunpack.c.l.b16 %v550
        %v720 = vunpack.c.l.b16 %v551
        %v721 = vunpack.c.l.b16 %v552
        %v722 = vunpack.c.l.b16 %v553
        %v723 = vunpack.c.l.b16 %v554
        %v724 = vunpack.c.l.b16 %v555
        %v725 = vunpack.c.l.b16 %v556
        %v726 = vunpack.c.l.b16 %v557
        %v727 = vunpack.c.l.b16 %v558
        %v728 = vunpack.c.l.b16 %v559
        %v729 = vpack.c.b16 %v714, %v713
        %v730 = vpack.c.b16 %v716, %v715
        %v731 = vpack.c.b16 %v718, %v717
        %v732 = vpack.c.b16 %v720, %v719
        %v733 = vpack.c.b16 %v722, %v721
        %v734 = vpack.c.b16 %v724, %v723
        %v735 = vpack.c.b16 %v726, %v725
        %v736 = vpack.c.b16 %v728, %v727
        %v761 = vunpack.c.l.b16 %v675
        %v762 = vunpack.c.l.b16 %v676
        %v763 = vunpack.c.l.b16 %v677
        %v764 = vunpack.c.l.b16 %v678
        %v765 = vunpack.c.l.b16 %v679
        %v766 = vunpack.c.l.b16 %v680
        %v767 = vunpack.c.l.b16 %v681
        %v768 = vunpack.c.l.b16 %v682
        %v769 = vunpack.c.l.b16 %v683
        %v770 = vunpack.c.l.b16 %v684
        %v771 = vunpack.c.l.b16 %v685
        %v772 = vunpack.c.l.b16 %v686
        %v773 = vunpack.c.l.b16 %v687
        %v774 = vunpack.c.l.b16 %v688
        %v775 = vunpack.c.l.b16 %v689
        %v776 = vunpack.c.l.b16 %v690
        %v777 = vpack.c.b16 %v762, %v761
        %v778 = vpack.c.b16 %v764, %v763
        %v779 = vpack.c.b16 %v766, %v765
        %v780 = vpack.c.b16 %v768, %v767
        %v781 = vpack.c.b16 %v770, %v769
        %v782 = vpack.c.b16 %v772, %v771
        %v783 = vpack.c.b16 %v774, %v773
        %v784 = vpack.c.b16 %v776, %v775
        %793 = vmatprep.subr.bf16.mxu0 0
        %794 = vmatpush1.bf16.msra.mxu0 %v777
        %795 = vmatprep.subr.bf16.mxu0 0
        %796 = vmatpush1.bf16.msra.mxu0 %v778
        %797 = vmatprep.subr.bf16.mxu0 0
        %798 = vmatpush1.bf16.msra.mxu0 %v779
        %799 = vmatprep.subr.bf16.mxu0 0
        %800 = vmatpush1.bf16.msra.mxu0 %v780
        %801 = vmatprep.subr.bf16.mxu0 0
        %802 = vmatpush1.bf16.msra.mxu0 %v781
        %803 = vmatprep.subr.bf16.mxu0 0
        %804 = vmatpush1.bf16.msra.mxu0 %v782
        %805 = vmatprep.subr.bf16.mxu0 0
        %806 = vmatpush1.bf16.msra.mxu0 %v783
        %807 = vmatprep.subr.bf16.mxu0 0
        %808 = vmatpush1.bf16.msra.mxu0 %v784
        %809 = vmatprep.subr.bf16.mxu0 0
        %810 = vmatpush1.bf16.msra.mxu0 0
        %811 = vmatprep.subr.bf16.mxu0 0
        %812 = vmatpush1.bf16.msra.mxu0 0
        %813 = vmatprep.subr.bf16.mxu0 0
        %814 = vmatpush1.bf16.msra.mxu0 0
        %815 = vmatprep.subr.bf16.mxu0 0
        %816 = vmatpush1.bf16.msra.mxu0 0
        %817 = vmatprep.subr.bf16.mxu0 0
        %818 = vmatpush1.bf16.msra.mxu0 0
        %819 = vmatprep.subr.bf16.mxu0 0
        %820 = vmatpush1.bf16.msra.mxu0 0
        %821 = vmatprep.subr.bf16.mxu0 0
        %822 = vmatpush1.bf16.msra.mxu0 0
        %823 = vmatprep.subr.bf16.mxu0 0
        %824 = vmatpush1.bf16.msra.mxu0 0
        %825 = vmatprep.mubr.bf16.mxu0 0
        %826 = vmatmul.mubr.bf16.gmra.mrb[0].mxu0 %v729
        %v827 = vpop.f32.mrb[0].mxu0
        %v828 = vadd.f32 %v695, %v827
        %v829 = vpop.f32.mrb[0].mxu0
        %v830 = vpop.f32.mrb[0].mxu0
        %v831 = vadd.f32 %v695, %v830
        %v832 = vpop.f32.mrb[0].mxu0
        %833 = vmatprep.mubr.bf16.mxu0 0
        %834 = vmatmul.mubr.bf16.gmra.mrb[0].mxu0 %v730
        %v835 = vpop.f32.mrb[0].mxu0
        %v836 = vadd.f32 %v695, %v835
        %v837 = vpop.f32.mrb[0].mxu0
        %v838 = vpop.f32.mrb[0].mxu0
        %v839 = vadd.f32 %v695, %v838
        %v840 = vpop.f32.mrb[0].mxu0
        %841 = vmatprep.mubr.bf16.mxu0 0
        %842 = vmatmul.mubr.bf16.gmra.mrb[0].mxu0 %v731
        %v843 = vpop.f32.mrb[0].mxu0
        %v844 = vadd.f32 %v695, %v843
        %v845 = vpop.f32.mrb[0].mxu0
        %v846 = vpop.f32.mrb[0].mxu0
        %v847 = vadd.f32 %v695, %v846
        %v848 = vpop.f32.mrb[0].mxu0
        %849 = vmatprep.mubr.bf16.mxu0 0
        %850 = vmatmul.mubr.bf16.gmra.mrb[0].mxu0 %v732
        %v851 = vpop.f32.mrb[0].mxu0
        %v852 = vadd.f32 %v695, %v851
        %v853 = vpop.f32.mrb[0].mxu0
        %v854 = vpop.f32.mrb[0].mxu0
        %v855 = vadd.f32 %v695, %v854
        %v856 = vpop.f32.mrb[0].mxu0
        %857 = vmatprep.mubr.bf16.mxu0 0
        %858 = vmatmul.mubr.bf16.gmra.mrb[0].mxu0 %v733
        %v859 = vpop.f32.mrb[0].mxu0
        %v860 = vadd.f32 %v695, %v859
        %v861 = vpop.f32.mrb[0].mxu0
        %v862 = vpop.f32.mrb[0].mxu0
        %v863 = vadd.f32 %v695, %v862
        %v864 = vpop.f32.mrb[0].mxu0
        %865 = vmatprep.mubr.bf16.mxu0 0
        %866 = vmatmul.mubr.bf16.gmra.mrb[0].mxu0 %v734
        %v867 = vpop.f32.mrb[0].mxu0
        %v868 = vadd.f32 %v695, %v867
        %v869 = vpop.f32.mrb[0].mxu0
        %v870 = vpop.f32.mrb[0].mxu0
        %v871 = vadd.f32 %v695, %v870
        %v872 = vpop.f32.mrb[0].mxu0
        %873 = vmatprep.mubr.bf16.mxu0 0
        %874 = vmatmul.mubr.bf16.gmra.mrb[0].mxu0 %v735
        %v875 = vpop.f32.mrb[0].mxu0
        %v876 = vadd.f32 %v695, %v875
        %v877 = vpop.f32.mrb[0].mxu0
        %v878 = vpop.f32.mrb[0].mxu0
        %v879 = vadd.f32 %v695, %v878
        %v880 = vpop.f32.mrb[0].mxu0
        %881 = vmatprep.mubr.bf16.mxu0 0
        %882 = vmatmul.mubr.bf16.gmra.mrb[0].mxu0 %v736
        %v883 = vpop.f32.mrb[0].mxu0
        %v884 = vadd.f32 %v695, %v883
        %v885 = vpop.f32.mrb[0].mxu0
        %v886 = vpop.f32.mrb[0].mxu0
        %v887 = vadd.f32 %v695, %v886
        %v888 = vpop.f32.mrb[0].mxu0
        %889 = vdwg.mxu0
        %v890 = vld [vmem:[#allocation10] sm:$0xf]
        %v891 = vld [vmem:[#allocation10 + $0x4] sm:$0xf]
        %v892 = vld [vmem:[#allocation10 + $0x8] sm:$0xf]
        %v893 = vld [vmem:[#allocation10 + $0xc] sm:$0xf]
        %v894 = vld [vmem:[#allocation10 + $0x10] sm:$0xf]
        %v895 = vld [vmem:[#allocation10 + $0x14] sm:$0xf]
        %v896 = vld [vmem:[#allocation10 + $0x18] sm:$0xf]
        %v897 = vld [vmem:[#allocation10 + $0x1c] sm:$0xf]
        %v898 = vld [vmem:[#allocation10 + $0x20] sm:$0xf]
        %v899 = vld [vmem:[#allocation10 + $0x24] sm:$0xf]
        %v900 = vld [vmem:[#allocation10 + $0x28] sm:$0xf]
        %v901 = vld [vmem:[#allocation10 + $0x2c] sm:$0xf]
        %v902 = vld [vmem:[#allocation10 + $0x30] sm:$0xf]
        %v903 = vld [vmem:[#allocation10 + $0x34] sm:$0xf]
        %v904 = vld [vmem:[#allocation10 + $0x38] sm:$0xf]
        %v905 = vld [vmem:[#allocation10 + $0x3c] sm:$0xf]
        %v907 = vlaneseq
        %v908 = vshrl.u32 %v907, 7
        %v909 = vsub.s32 0, %v908
        %v910 = vrot.slane %v562, %v909
        %v928 = vunpack.c.l.b16 %v890
        %v929 = vunpack.c.l.b16 %v891
        %v930 = vunpack.c.l.b16 %v892
        %v931 = vunpack.c.l.b16 %v893
        %v932 = vunpack.c.l.b16 %v894
        %v933 = vunpack.c.l.b16 %v895
        %v934 = vunpack.c.l.b16 %v896
        %v935 = vunpack.c.l.b16 %v897
        %v936 = vunpack.c.l.b16 %v898
        %v937 = vunpack.c.l.b16 %v899
        %v938 = vunpack.c.l.b16 %v900
        %v939 = vunpack.c.l.b16 %v901
        %v940 = vunpack.c.l.b16 %v902
        %v941 = vunpack.c.l.b16 %v903
        %v942 = vunpack.c.l.b16 %v904
        %v943 = vunpack.c.l.b16 %v905
        %v944 = vpack.c.b16 %v929, %v928
        %v945 = vpack.c.b16 %v931, %v930
        %v946 = vpack.c.b16 %v933, %v932
        %v947 = vpack.c.b16 %v935, %v934
        %v948 = vpack.c.b16 %v937, %v936
        %v949 = vpack.c.b16 %v939, %v938
        %v950 = vpack.c.b16 %v941, %v940
        %v951 = vpack.c.b16 %v943, %v942
        %960 = vmatprep.subr.bf16.mxu0 0
        %961 = vmatpush1.bf16.msra.mxu0 %v944
        %962 = vmatprep.subr.bf16.mxu0 0
        %963 = vmatpush1.bf16.msra.mxu0 %v945
        %964 = vmatprep.subr.bf16.mxu0 0
        %965 = vmatpush1.bf16.msra.mxu0 %v946
        %966 = vmatprep.subr.bf16.mxu0 0
        %967 = vmatpush1.bf16.msra.mxu0 %v947
        %968 = vmatprep.subr.bf16.mxu0 0
        %969 = vmatpush1.bf16.msra.mxu0 %v948
        %970 = vmatprep.subr.bf16.mxu0 0
        %971 = vmatpush1.bf16.msra.mxu0 %v949
        %972 = vmatprep.subr.bf16.mxu0 0
        %973 = vmatpush1.bf16.msra.mxu0 %v950
        %974 = vmatprep.subr.bf16.mxu0 0
        %975 = vmatpush1.bf16.msra.mxu0 %v951
        %976 = vmatprep.subr.bf16.mxu0 0
        %977 = vmatpush1.bf16.msra.mxu0 0
        %978 = vmatprep.subr.bf16.mxu0 0
        %979 = vmatpush1.bf16.msra.mxu0 0
        %980 = vmatprep.subr.bf16.mxu0 0
        %981 = vmatpush1.bf16.msra.mxu0 0
        %982 = vmatprep.subr.bf16.mxu0 0
        %983 = vmatpush1.bf16.msra.mxu0 0
        %984 = vmatprep.subr.bf16.mxu0 0
        %985 = vmatpush1.bf16.msra.mxu0 0
        %986 = vmatprep.subr.bf16.mxu0 0
        %987 = vmatpush1.bf16.msra.mxu0 0
        %988 = vmatprep.subr.bf16.mxu0 0
        %989 = vmatpush1.bf16.msra.mxu0 0
        %990 = vmatprep.subr.bf16.mxu0 0
        %991 = vmatpush1.bf16.msra.mxu0 0
        %992 = vmatprep.mubr.bf16.mxu0 0
        %993 = vmatmul.mubr.bf16.gmra.mrb[0].mxu0 %v729
        %v994 = vpop.f32.mrb[0].mxu0
        %v995 = vadd.f32 %v910, %v994
        %v996 = vpop.f32.mrb[0].mxu0
        %v997 = vpop.f32.mrb[0].mxu0
        %v998 = vadd.f32 %v910, %v997
        %v999 = vpop.f32.mrb[0].mxu0
        %1000 = vmatprep.mubr.bf16.mxu0 0
        %1001 = vmatmul.mubr.bf16.gmra.mrb[0].mxu0 %v730
        %v1002 = vpop.f32.mrb[0].mxu0
        %v1003 = vadd.f32 %v910, %v1002
        %v1004 = vpop.f32.mrb[0].mxu0
        %v1005 = vpop.f32.mrb[0].mxu0
        %v1006 = vadd.f32 %v910, %v1005
        %v1007 = vpop.f32.mrb[0].mxu0
        %1008 = vmatprep.mubr.bf16.mxu0 0
        %1009 = vmatmul.mubr.bf16.gmra.mrb[0].mxu0 %v731
        %v1010 = vpop.f32.mrb[0].mxu0
        %v1011 = vadd.f32 %v910, %v1010
        %v1012 = vpop.f32.mrb[0].mxu0
        %v1013 = vpop.f32.mrb[0].mxu0
        %v1014 = vadd.f32 %v910, %v1013
        %v1015 = vpop.f32.mrb[0].mxu0
        %1016 = vmatprep.mubr.bf16.mxu0 0
        %1017 = vmatmul.mubr.bf16.gmra.mrb[0].mxu0 %v732
        %v1018 = vpop.f32.mrb[0].mxu0
        %v1019 = vadd.f32 %v910, %v1018
        %v1020 = vpop.f32.mrb[0].mxu0
        %v1021 = vpop.f32.mrb[0].mxu0
        %v1022 = vadd.f32 %v910, %v1021
        %v1023 = vpop.f32.mrb[0].mxu0
        %1024 = vmatprep.mubr.bf16.mxu0 0
        %1025 = vmatmul.mubr.bf16.gmra.mrb[0].mxu0 %v733
        %v1026 = vpop.f32.mrb[0].mxu0
        %v1027 = vadd.f32 %v910, %v1026
        %v1028 = vpop.f32.mrb[0].mxu0
        %v1029 = vpop.f32.mrb[0].mxu0
        %v1030 = vadd.f32 %v910, %v1029
        %v1031 = vpop.f32.mrb[0].mxu0
        %1032 = vmatprep.mubr.bf16.mxu0 0
        %1033 = vmatmul.mubr.bf16.gmra.mrb[0].mxu0 %v734
        %v1034 = vpop.f32.mrb[0].mxu0
        %v1035 = vadd.f32 %v910, %v1034
        %v1036 = vpop.f32.mrb[0].mxu0
        %v1037 = vpop.f32.mrb[0].mxu0
        %v1038 = vadd.f32 %v910, %v1037
        %v1039 = vpop.f32.mrb[0].mxu0
        %1040 = vmatprep.mubr.bf16.mxu0 0
        %1041 = vmatmul.mubr.bf16.gmra.mrb[0].mxu0 %v735
        %v1042 = vpop.f32.mrb[0].mxu0
        %v1043 = vadd.f32 %v910, %v1042
        %v1044 = vpop.f32.mrb[0].mxu0
        %v1045 = vpop.f32.mrb[0].mxu0
        %v1046 = vadd.f32 %v910, %v1045
        %v1047 = vpop.f32.mrb[0].mxu0
        %1048 = vmatprep.mubr.bf16.mxu0 0
        %1049 = vmatmul.mubr.bf16.gmra.mrb[0].mxu0 %v736
        %v1050 = vpop.f32.mrb[0].mxu0
        %v1051 = vadd.f32 %v910, %v1050
        %v1052 = vpop.f32.mrb[0].mxu0
        %v1053 = vpop.f32.mrb[0].mxu0
        %v1054 = vadd.f32 %v910, %v1053
        %v1055 = vpop.f32.mrb[0].mxu0
        %1056 = vdwg.mxu0
        %v1057 = vpack.c.bf16 %v670, %v670
        %v1058 = vpack.c.bf16 %v831, %v828
        %v1059 = vpack.c.bf16 %v839, %v836
        %v1060 = vpack.c.bf16 %v847, %v844
        %v1061 = vpack.c.bf16 %v855, %v852
        %v1062 = vpack.c.bf16 %v863, %v860
        %v1063 = vpack.c.bf16 %v871, %v868
        %v1064 = vpack.c.bf16 %v879, %v876
        %v1065 = vpack.c.bf16 %v887, %v884
        %v1066 = vpack.c.bf16 %v998, %v995
        %v1067 = vpack.c.bf16 %v1006, %v1003
        %v1068 = vpack.c.bf16 %v1014, %v1011
        %v1069 = vpack.c.bf16 %v1022, %v1019
        %v1070 = vpack.c.bf16 %v1030, %v1027
        %v1071 = vpack.c.bf16 %v1038, %v1035
        %v1072 = vpack.c.bf16 %v1046, %v1043
        %v1073 = vpack.c.bf16 %v1054, %v1051
        %1074 = vmatprep.subr.bf16.mxu0 0
        %1075 = vmatpush1.bf16.xpose.msra.mxu0 %v1058
        %1076 = vmatprep.subr.bf16.mxu0 0
        %1077 = vmatpush1.bf16.xpose.msra.mxu0 %v1059
        %1078 = vmatprep.subr.bf16.mxu0 0
        %1079 = vmatpush1.bf16.xpose.msra.mxu0 %v1060
        %1080 = vmatprep.subr.bf16.mxu0 0
        %1081 = vmatpush1.bf16.xpose.msra.mxu0 %v1061
        %1082 = vmatprep.subr.bf16.mxu0 0
        %1083 = vmatpush1.bf16.xpose.msra.mxu0 %v1062
        %1084 = vmatprep.subr.bf16.mxu0 0
        %1085 = vmatpush1.bf16.xpose.msra.mxu0 %v1063
        %1086 = vmatprep.subr.bf16.mxu0 0
        %1087 = vmatpush1.bf16.xpose.msra.mxu0 %v1064
        %1088 = vmatprep.subr.bf16.mxu0 0
        %1089 = vmatpush1.bf16.xpose.msra.mxu0 %v1065
        %1090 = vmatprep.subr.bf16.mxu0 0
        %1091 = vmatpush1.bf16.xpose.msra.mxu0 0
        %1092 = vmatprep.subr.bf16.mxu0 0
        %1093 = vmatpush1.bf16.xpose.msra.mxu0 0
        %1094 = vmatprep.subr.bf16.mxu0 0
        %1095 = vmatpush1.bf16.xpose.msra.mxu0 0
        %1096 = vmatprep.subr.bf16.mxu0 0
        %1097 = vmatpush1.bf16.xpose.msra.mxu0 0
        %1098 = vmatprep.subr.bf16.mxu0 0
        %1099 = vmatpush1.bf16.xpose.msra.mxu0 0
        %1100 = vmatprep.subr.bf16.mxu0 0
        %1101 = vmatpush1.bf16.xpose.msra.mxu0 0
        %1102 = vmatprep.subr.bf16.mxu0 0
        %1103 = vmatpush1.bf16.xpose.msra.mxu0 0
        %1104 = vmatprep.subr.bf16.mxu0 0
        %1105 = vmatpush1.bf16.xpose.msra.mxu0 0
        %1106 = vmatprep.mubr.bf16.mxu0 0
        %1107 = vmatmul.mubr.bf16.gmra.mrb[0].mxu0 %v1057
        %v1108 = vpop.f32.mrb[0].mxu0
        %v1109 = vadd.f32 0.0, %v1108
        %v1110 = vpop.f32.mrb[0].mxu0
        %v1111 = vpop.f32.mrb[0].mxu0
        %v1112 = vpop.f32.mrb[0].mxu0
        %1113 = vdwg.mxu0
        %v1114 = vlaneseq
        %v1115 = vand.u32 %v1114, 127
        %vm1116 = vcmp.lt.s32.totalorder %v1115, 8
        %v1117 = vsel %vm1116, 1, 0
        %vm1118 = vcmp.eq.s32.totalorder %v1117, 1
        %v1119 = vsel %vm1118, %v1109, -1e+30
        %1120 = vmax.xlane.f32.xlu0 %v1119
        %v1121 = vpop.xlane.xlu0 %1120
        %v1122 = vsub.f32 %v1119, %v1121
        %v1123 = vmul.f32 %v1122, 1.442695
        %v1124 = vpow.pop %v1123
        %1125 = vadd.xlane.f32.xlu0 %v1124
        %v1126 = vpop.xlane.xlu0 %1125
        %v1127 = vrcp.pop %v1126
        %v1128 = vmul.f32 %v1124, %v1127
        %v1129 = vpack.c.bf16 %v1128, %v1128
        %1130 = vmatprep.subr.bf16.mxu0 0
        %1131 = vmatpush1.bf16.msra.mxu0 %v1066
        %1132 = vmatprep.subr.bf16.mxu0 0
        %1133 = vmatpush1.bf16.msra.mxu0 %v1067
        %1134 = vmatprep.subr.bf16.mxu0 0
        %1135 = vmatpush1.bf16.msra.mxu0 %v1068
        %1136 = vmatprep.subr.bf16.mxu0 0
        %1137 = vmatpush1.bf16.msra.mxu0 %v1069
        %1138 = vmatprep.subr.bf16.mxu0 0
        %1139 = vmatpush1.bf16.msra.mxu0 %v1070
        %1140 = vmatprep.subr.bf16.mxu0 0
        %1141 = vmatpush1.bf16.msra.mxu0 %v1071
        %1142 = vmatprep.subr.bf16.mxu0 0
        %1143 = vmatpush1.bf16.msra.mxu0 %v1072
        %1144 = vmatprep.subr.bf16.mxu0 0
        %1145 = vmatpush1.bf16.msra.mxu0 %v1073
        %1146 = vmatprep.subr.bf16.mxu0 0
        %1147 = vmatpush1.bf16.msra.mxu0 0
        %1148 = vmatprep.subr.bf16.mxu0 0
        %1149 = vmatpush1.bf16.msra.mxu0 0
        %1150 = vmatprep.subr.bf16.mxu0 0
        %1151 = vmatpush1.bf16.msra.mxu0 0
        %1152 = vmatprep.subr.bf16.mxu0 0
        %1153 = vmatpush1.bf16.msra.mxu0 0
        %1154 = vmatprep.subr.bf16.mxu0 0
        %1155 = vmatpush1.bf16.msra.mxu0 0
        %1156 = vmatprep.subr.bf16.mxu0 0
        %1157 = vmatpush1.bf16.msra.mxu0 0
        %1158 = vmatprep.subr.bf16.mxu0 0
        %1159 = vmatpush1.bf16.msra.mxu0 0
        %1160 = vmatprep.subr.bf16.mxu0 0
        %1161 = vmatpush1.bf16.msra.mxu0 0
        %1162 = vmatprep.mubr.bf16.mxu0 0
        %1163 = vmatmul.mubr.bf16.gmra.mrb[0].mxu0 %v1129
        %v1164 = vpop.f32.mrb[0].mxu0
        %v1165 = vadd.f32 %v543, %v1164
        %v1166 = vpop.f32.mrb[0].mxu0
        %v1167 = vpop.f32.mrb[0].mxu0
        %v1168 = vpop.f32.mrb[0].mxu0
        %1169 = vdwg.mxu0
        %v1170 = vpack.c.bf16 %v1165, %v1165
        %v1171 = vld [vmem:[#allocation11] sm:$0xf]
        %v1172 = vld [vmem:[#allocation11 + $0x4] sm:$0xf]
        %v1173 = vld [vmem:[#allocation11 + $0x8] sm:$0xf]
        %v1174 = vld [vmem:[#allocation11 + $0xc] sm:$0xf]
        %v1175 = vld [vmem:[#allocation11 + $0x10] sm:$0xf]
        %v1176 = vld [vmem:[#allocation11 + $0x14] sm:$0xf]
        %v1177 = vld [vmem:[#allocation11 + $0x18] sm:$0xf]
        %v1178 = vld [vmem:[#allocation11 + $0x1c] sm:$0xf]
        %v1179 = vld [vmem:[#allocation11 + $0x20] sm:$0xf]
        %v1180 = vld [vmem:[#allocation11 + $0x24] sm:$0xf]
        %v1181 = vld [vmem:[#allocation11 + $0x28] sm:$0xf]
        %v1182 = vld [vmem:[#allocation11 + $0x2c] sm:$0xf]
        %v1183 = vld [vmem:[#allocation11 + $0x30] sm:$0xf]
        %v1184 = vld [vmem:[#allocation11 + $0x34] sm:$0xf]
        %v1185 = vld [vmem:[#allocation11 + $0x38] sm:$0xf]
        %v1186 = vld [vmem:[#allocation11 + $0x3c] sm:$0xf]
        %v1188 = vlaneseq
        %v1189 = vshrl.u32 %v1188, 7
        %v1190 = vsub.s32 0, %v1189
        %v1191 = vrot.slane %v563, %v1190
        %v1209 = vunpack.c.l.b16 %v1171
        %v1210 = vunpack.c.l.b16 %v1172
        %v1211 = vunpack.c.l.b16 %v1173
        %v1212 = vunpack.c.l.b16 %v1174
        %v1213 = vunpack.c.l.b16 %v1175
        %v1214 = vunpack.c.l.b16 %v1176
        %v1215 = vunpack.c.l.b16 %v1177
        %v1216 = vunpack.c.l.b16 %v1178
        %v1217 = vunpack.c.l.b16 %v1179
        %v1218 = vunpack.c.l.b16 %v1180
        %v1219 = vunpack.c.l.b16 %v1181
        %v1220 = vunpack.c.l.b16 %v1182
        %v1221 = vunpack.c.l.b16 %v1183
        %v1222 = vunpack.c.l.b16 %v1184
        %v1223 = vunpack.c.l.b16 %v1185
        %v1224 = vunpack.c.l.b16 %v1186
        %v1225 = vpack.c.b16 %v1210, %v1209
        %v1226 = vpack.c.b16 %v1212, %v1211
        %v1227 = vpack.c.b16 %v1214, %v1213
        %v1228 = vpack.c.b16 %v1216, %v1215
        %v1229 = vpack.c.b16 %v1218, %v1217
        %v1230 = vpack.c.b16 %v1220, %v1219
        %v1231 = vpack.c.b16 %v1222, %v1221
        %v1232 = vpack.c.b16 %v1224, %v1223
        %1241 = vmatprep.subr.bf16.mxu0 0
        %1242 = vmatpush1.bf16.msra.mxu0 %v1225
        %1243 = vmatprep.subr.bf16.mxu0 0
        %1244 = vmatpush1.bf16.msra.mxu0 %v1226
        %1245 = vmatprep.subr.bf16.mxu0 0
        %1246 = vmatpush1.bf16.msra.mxu0 %v1227
        %1247 = vmatprep.subr.bf16.mxu0 0
        %1248 = vmatpush1.bf16.msra.mxu0 %v1228
        %1249 = vmatprep.subr.bf16.mxu0 0
        %1250 = vmatpush1.bf16.msra.mxu0 %v1229
        %1251 = vmatprep.subr.bf16.mxu0 0
        %1252 = vmatpush1.bf16.msra.mxu0 %v1230
        %1253 = vmatprep.subr.bf16.mxu0 0
        %1254 = vmatpush1.bf16.msra.mxu0 %v1231
        %1255 = vmatprep.subr.bf16.mxu0 0
        %1256 = vmatpush1.bf16.msra.mxu0 %v1232
        %1257 = vmatprep.subr.bf16.mxu0 0
        %1258 = vmatpush1.bf16.msra.mxu0 0
        %1259 = vmatprep.subr.bf16.mxu0 0
        %1260 = vmatpush1.bf16.msra.mxu0 0
        %1261 = vmatprep.subr.bf16.mxu0 0
        %1262 = vmatpush1.bf16.msra.mxu0 0
        %1263 = vmatprep.subr.bf16.mxu0 0
        %1264 = vmatpush1.bf16.msra.mxu0 0
        %1265 = vmatprep.subr.bf16.mxu0 0
        %1266 = vmatpush1.bf16.msra.mxu0 0
        %1267 = vmatprep.subr.bf16.mxu0 0
        %1268 = vmatpush1.bf16.msra.mxu0 0
        %1269 = vmatprep.subr.bf16.mxu0 0
        %1270 = vmatpush1.bf16.msra.mxu0 0
        %1271 = vmatprep.subr.bf16.mxu0 0
        %1272 = vmatpush1.bf16.msra.mxu0 0
        %1273 = vmatprep.mubr.bf16.mxu0 0
        %1274 = vmatmul.mubr.bf16.gmra.mrb[0].mxu0 %v1170
        %v1275 = vpop.f32.mrb[0].mxu0
        %v1276 = vadd.f32 %v1191, %v1275
        %v1277 = vpop.f32.mrb[0].mxu0
        %v1278 = vpop.f32.mrb[0].mxu0
        %v1279 = vpop.f32.mrb[0].mxu0
        %1280 = vdwg.mxu0
        %v1281 = vmax.f32 %v1276, 0.0
        %v1282 = vpack.c.bf16 %v1281, %v1281
        %v1283 = vld [vmem:[#allocation13] sm:$0xf]
        %v1284 = vld [vmem:[#allocation13 + $0x4] sm:$0xf]
        %v1285 = vld [vmem:[#allocation13 + $0x8] sm:$0xf]
        %v1286 = vld [vmem:[#allocation13 + $0xc] sm:$0xf]
        %v1287 = vld [vmem:[#allocation13 + $0x10] sm:$0xf]
        %v1288 = vld [vmem:[#allocation13 + $0x14] sm:$0xf]
        %v1289 = vld [vmem:[#allocation13 + $0x18] sm:$0xf]
        %v1290 = vld [vmem:[#allocation13 + $0x1c] sm:$0xf]
        %v1291 = vld [vmem:[#allocation13 + $0x20] sm:$0xf]
        %v1292 = vld [vmem:[#allocation13 + $0x24] sm:$0xf]
        %v1293 = vld [vmem:[#allocation13 + $0x28] sm:$0xf]
        %v1294 = vld [vmem:[#allocation13 + $0x2c] sm:$0xf]
        %v1295 = vld [vmem:[#allocation13 + $0x30] sm:$0xf]
        %v1296 = vld [vmem:[#allocation13 + $0x34] sm:$0xf]
        %v1297 = vld [vmem:[#allocation13 + $0x38] sm:$0xf]
        %v1298 = vld [vmem:[#allocation13 + $0x3c] sm:$0xf]
        %v1300 = vlaneseq
        %v1301 = vshrl.u32 %v1300, 7
        %v1302 = vsub.s32 0, %v1301
        %v1303 = vrot.slane %v564, %v1302
        %v1321 = vunpack.c.l.b16 %v1283
        %v1322 = vunpack.c.l.b16 %v1284
        %v1323 = vunpack.c.l.b16 %v1285
        %v1324 = vunpack.c.l.b16 %v1286
        %v1325 = vunpack.c.l.b16 %v1287
        %v1326 = vunpack.c.l.b16 %v1288
        %v1327 = vunpack.c.l.b16 %v1289
        %v1328 = vunpack.c.l.b16 %v1290
        %v1329 = vunpack.c.l.b16 %v1291
        %v1330 = vunpack.c.l.b16 %v1292
        %v1331 = vunpack.c.l.b16 %v1293
        %v1332 = vunpack.c.l.b16 %v1294
        %v1333 = vunpack.c.l.b16 %v1295
        %v1334 = vunpack.c.l.b16 %v1296
        %v1335 = vunpack.c.l.b16 %v1297
        %v1336 = vunpack.c.l.b16 %v1298
        %v1337 = vpack.c.b16 %v1322, %v1321
        %v1338 = vpack.c.b16 %v1324, %v1323
        %v1339 = vpack.c.b16 %v1326, %v1325
        %v1340 = vpack.c.b16 %v1328, %v1327
        %v1341 = vpack.c.b16 %v1330, %v1329
        %v1342 = vpack.c.b16 %v1332, %v1331
        %v1343 = vpack.c.b16 %v1334, %v1333
        %v1344 = vpack.c.b16 %v1336, %v1335
        %1353 = vmatprep.subr.bf16.mxu0 0
        %1354 = vmatpush1.bf16.msra.mxu0 %v1337
        %1355 = vmatprep.subr.bf16.mxu0 0
        %1356 = vmatpush1.bf16.msra.mxu0 %v1338
        %1357 = vmatprep.subr.bf16.mxu0 0
        %1358 = vmatpush1.bf16.msra.mxu0 %v1339
        %1359 = vmatprep.subr.bf16.mxu0 0
        %1360 = vmatpush1.bf16.msra.mxu0 %v1340
        %1361 = vmatprep.subr.bf16.mxu0 0
        %1362 = vmatpush1.bf16.msra.mxu0 %v1341
        %1363 = vmatprep.subr.bf16.mxu0 0
        %1364 = vmatpush1.bf16.msra.mxu0 %v1342
        %1365 = vmatprep.subr.bf16.mxu0 0
        %1366 = vmatpush1.bf16.msra.mxu0 %v1343
        %1367 = vmatprep.subr.bf16.mxu0 0
        %1368 = vmatpush1.bf16.msra.mxu0 %v1344
        %1369 = vmatprep.subr.bf16.mxu0 0
        %1370 = vmatpush1.bf16.msra.mxu0 0
        %1371 = vmatprep.subr.bf16.mxu0 0
        %1372 = vmatpush1.bf16.msra.mxu0 0
        %1373 = vmatprep.subr.bf16.mxu0 0
        %1374 = vmatpush1.bf16.msra.mxu0 0
        %1375 = vmatprep.subr.bf16.mxu0 0
        %1376 = vmatpush1.bf16.msra.mxu0 0
        %1377 = vmatprep.subr.bf16.mxu0 0
        %1378 = vmatpush1.bf16.msra.mxu0 0
        %1379 = vmatprep.subr.bf16.mxu0 0
        %1380 = vmatpush1.bf16.msra.mxu0 0
        %1381 = vmatprep.subr.bf16.mxu0 0
        %1382 = vmatpush1.bf16.msra.mxu0 0
        %1383 = vmatprep.subr.bf16.mxu0 0
        %1384 = vmatpush1.bf16.msra.mxu0 0
        %1385 = vmatprep.mubr.bf16.mxu0 0
        %1386 = vmatmul.mubr.bf16.gmra.mrb[0].mxu0 %v1282
        %v1387 = vpop.f32.mrb[0].mxu0
        %v1388 = vadd.f32 %v1303, %v1387
        %v1389 = vpop.f32.mrb[0].mxu0
        %v1390 = vpop.f32.mrb[0].mxu0
        %v1391 = vpop.f32.mrb[0].mxu0
        %1392 = vdwg.mxu0
        %1393 = vst [vmem:[%s540] sm:$0xff] %v1388
        %s1394 = sand.u32 %s304, 1
        %s1395 = scalar_lea.sflag [#allocation4], %s1394
        %s1396 = sand.u32 %s304, 1
        %s1397 = smul.addr %s1396, 8
        %s1398 = scalar_lea.vmem [#allocation14], %s1397
        // Predicated region
        $region97: #{tpu_custom_call.1} parent=67 // pred_check
          %p1399 = pneg %p314
        $region98: #{tpu_custom_call.1} parent=67 // pred_check_branch
          %1401 = sbr.rel (%p1399) target = $region100
        $region99: #{tpu_custom_call.1} parent=67 // pred_region
          %s1403 = ssub.s32 128, 128
          %1404 = vsyncadd %s1395, %s1403
          %s1405 = smul.addr %s34, 128
          %s1406 = scalar_lea.hbm %s12, %s1405
          %s1408 = sshll.u32 %s1398, 4
          %s1409 = int_to_ptr.vmem [resolvable:$true] %s1408
          %1411 = dma.vmem_to_hbm [thread:$0]  %s1409, 128, %s1406, %s1395
        $region100: #{tpu_custom_call.1} parent=67 // pred_fallthru
          _
      $region68: #{tpu_custom_call.1} parent=5 // pred_fallthru
        _
      %p1412 = scmp.le.s32.totalorder 2, %s29
      // Predicated region
      $region101: #{tpu_custom_call.1} parent=5 // pred_check
        %p1413 = pneg %p1412
      $region102: #{tpu_custom_call.1} parent=5 // pred_check_branch
        %1415 = sbr.rel (%p1413) target = $region104
      $region103: #{tpu_custom_call.1} parent=5 // pred_region
        %s1416 = ssub.s32 %s29, 2
        // Predicated region
        $region105: #{tpu_custom_call.1} parent=103 // pred_check
          %p1417 = pneg %p320
        $region106: #{tpu_custom_call.1} parent=103 // pred_check_branch
          %1419 = sbr.rel (%p1417) target = $region108
        $region107: #{tpu_custom_call.1} parent=103 // pred_region
          %s1420 = sand.u32 %s305, 1
          %s1421 = scalar_lea.sflag [#allocation4], %s1420
          %s1422 = sand.u32 %s305, 1
          %s1423 = smul.addr %s1422, 8
          %s1424 = scalar_lea.vmem [#allocation14], %s1423
          %1425 = dma.done %s1421, 128
        $region108: #{tpu_custom_call.1} parent=103 // pred_fallthru
          _
      $region104: #{tpu_custom_call.1} parent=5 // pred_fallthru
        _
    $region6: #{tpu_custom_call.1} parent=1 // loop_footer
      %s33 = sadd.s32 1, %s29
    $region7: #{tpu_custom_call.1} parent=1 // loop_footer_branch
      %28 = sbr.rel target = $region3
    $region8: #{tpu_custom_call.1} parent=1 // loop_exit
      _
    %1426 = vsyncpa [#allocation3], 1
    %s1427 = scalar_lea.sflag [#allocation3], 1
    %1428 = vsyncpa %s1427, 1
    %1429 = vsyncpa [#allocation6], 1
    %s1430 = scalar_lea.sflag [#allocation6], 1
    %1431 = vsyncpa %s1430, 1
    %1432 = vsyncpa [#allocation9], 1
    %1433 = vsyncpa [#allocation12], 1
    %1434 = vsyncpa [#allocation4], 1
    %s1435 = scalar_lea.sflag [#allocation4], 1
    %1436 = vsyncpa %s1435, 1

</llo_original>
